<compile_context>
chip_gen: v7x
topology: tpu7x:2x2x1
jax: 0.10.0
libtpu: 0.0.40
codegen_flags: <defaults>
</compile_context>

<pallas_src>
import functools

import jax
import jax.numpy as jnp
from jax.experimental import pallas as pl
from jax.experimental.pallas import tpu as pltpu


def _round_up(v: int, m: int) -> int:
    return ((v + m - 1) // m) * m


def _fused_gcn_kernel(x_ref, adj_ref, w1_ref, b1_ref, w2_ref, b2_ref,
                      out_ref, hacc_ref, s2_ref, *, block_k):
    """grid = (phase, k).  phase 0: build hidden; phase 1: build output."""
    phase = pl.program_id(0)
    k = pl.program_id(1)
    nk = pl.num_programs(1)

    # ---------------- phase 0: hacc += adj[:, kblk] @ (x[kblk] @ W1) ----------
    @pl.when(jnp.logical_and(phase == 0, k == 0))
    def _():
        hacc_ref[...] = jnp.zeros_like(hacc_ref)

    @pl.when(phase == 0)
    def _():
        # support1 block: (block_k, HID_P), f32 accumulate on the MXU.
        s1_blk = jnp.dot(x_ref[...], w1_ref[...],
                         preferred_element_type=jnp.float32)
        hacc_ref[...] += jnp.dot(adj_ref[...], s1_blk.astype(adj_ref.dtype),
                                 preferred_element_type=jnp.float32)

    # ----- phase 0 finalize: h = relu(hacc + b1); stage support2 = h @ W2 -----
    @pl.when(jnp.logical_and(phase == 0, k == nk - 1))
    def _():
        h = jnp.maximum(hacc_ref[...] + b1_ref[...], 0.0)
        # TODO(synk): training-mode dropout would go here, in-kernel, using
        # pltpu.prng_seed / pltpu.prng_random_bits on the VMEM-resident h.
        s2_ref[...] = jnp.dot(h.astype(s2_ref.dtype), w2_ref[...],
                              preferred_element_type=jnp.float32
                              ).astype(s2_ref.dtype)

    # ---------------- phase 1: out = b2 + sum_k adj[:, kblk] @ s2[kblk] -------
    @pl.when(jnp.logical_and(phase == 1, k == 0))
    def _():
        out_ref[...] = jnp.broadcast_to(b2_ref[...], out_ref.shape
                                        ).astype(out_ref.dtype)

    @pl.when(phase == 1)
    def _():
        k0 = pl.multiple_of(k * block_k, block_k)
        s2_blk = s2_ref[pl.ds(k0, block_k), :]
        out_ref[...] += jnp.dot(adj_ref[...], s2_blk,
                                preferred_element_type=jnp.float32
                                ).astype(out_ref.dtype)


def gcn_forward(x, adj, params, *, dropout_rate=0.5, training=False,
                block_k=None):
    """Matches GCN.forward: x = relu(gc1(x, adj)); x = dropout(x); x = gc2(x, adj)."""
    n, nfeat = x.shape
    nhid = params["w1"].shape[1]
    nout = params["w2"].shape[1]
    assert adj.shape == (n, n)
    assert params["w2"].shape[0] == nhid

    if training and dropout_rate > 0.0:
        # TODO(synk): stochastic training-mode dropout not reproduced; eval mode
        # (identity) matches the PyTorch module with model.eval().
        pass

    f32, bf16 = jnp.float32, jnp.bfloat16

    hid_p = max(_round_up(nhid, 128), 128)   # lane-dense hidden width
    out_p = max(_round_up(nout, 128), 128)   # lane-dense output width

    if block_k is None:
        block_k = 128 if n % 128 == 0 else n
    assert n % 8 == 0, "number of nodes must be a multiple of 8"
    assert n % block_k == 0 and (block_k % 128 == 0 or block_k == n), (
        "adjacency column-block size must be a multiple of 128 (or the full N)")
    nk = n // block_k

    # Zero-pad feature axes to lane-dense widths; padded columns stay exactly 0
    # through bias/relu, so slicing them off at the end is exact.
    w1 = jnp.pad(params["w1"].astype(f32), ((0, 0), (0, hid_p - nhid))).astype(bf16)
    b1 = jnp.pad(params["b1"].astype(f32), ((0, 0), (0, hid_p - nhid)))
    w2 = jnp.pad(params["w2"].astype(f32),
                 ((0, hid_p - nhid), (0, out_p - nout))).astype(bf16)
    b2 = jnp.pad(params["b2"].astype(f32), ((0, 0), (0, out_p - nout)))

    # bf16 MXU inputs; all accumulation stays f32 inside the kernel.
    xb = x.astype(bf16)
    adjb = adj.astype(bf16)

    # Rough VMEM budget guard (scratch + resident output + double-buffered blocks).
    vmem_est = (n * hid_p * 4 + n * out_p * 2          # hacc (f32) + support2 (bf16)
                + n * out_p * 4                        # resident output accumulator
                + 2 * n * block_k * 2                  # adj column blocks (2 bufs)
                + 2 * block_k * nfeat * 2              # x row blocks (2 bufs)
                + 2 * (nfeat * hid_p + hid_p * out_p) * 2
                + 2 * (hid_p + out_p) * 4)
    assert vmem_est < 24 * 1024 * 1024, f"tiling does not fit VMEM ({vmem_est} B)"

    flops = (2 * n * nfeat * hid_p + 2 * n * n * hid_p
             + 2 * n * hid_p * out_p + 2 * n * n * out_p)
    bytes_accessed = (2 * adjb.size * 2          # adj read once per phase (bf16)
                      + xb.size * 2 + w1.size * 2 + w2.size * 2
                      + (b1.size + b2.size) * 4
                      + n * out_p * 4)           # output write
    cost = pl.CostEstimate(flops=flops, transcendentals=0,
                           bytes_accessed=int(bytes_accessed))

    grid_spec = pltpu.PrefetchScalarGridSpec(
        num_scalar_prefetch=0,
        grid=(2, nk),                                        # (phase, reduction k)
        in_specs=[
            # x row-block k (only needed in phase 0; pinned to block 0 in phase 1
            # so it is not re-streamed from HBM during phase 1).
            pl.BlockSpec((block_k, nfeat), lambda p, k: ((1 - p) * k, 0)),
            # adj column-block k, all rows.
            pl.BlockSpec((n, block_k), lambda p, k: (0, k)),
            pl.BlockSpec((nfeat, hid_p), lambda p, k: (0, 0)),   # w1
            pl.BlockSpec((1, hid_p), lambda p, k: (0, 0)),       # b1
            pl.BlockSpec((hid_p, out_p), lambda p, k: (0, 0)),   # w2
            pl.BlockSpec((1, out_p), lambda p, k: (0, 0)),       # b2
        ],
        # Output block index is constant -> stays VMEM-resident as an accumulator
        # and is written back to HBM exactly once, lane-dense (out_p = 128k).
        out_specs=pl.BlockSpec((n, out_p), lambda p, k: (0, 0)),
        scratch_shapes=[
            pltpu.VMEM((n, hid_p), f32),      # hidden-layer f32 accumulator
            pltpu.VMEM((n, out_p), bf16),     # support2 = relu(h) @ W2
        ],
    )

    out_padded = pl.pallas_call(
        functools.partial(_fused_gcn_kernel, block_k=block_k),
        out_shape=jax.ShapeDtypeStruct((n, out_p), f32),
        grid_spec=grid_spec,
        compiler_params=pltpu.CompilerParams(
            # Phase 1 depends on all of phase 0 through VMEM scratch, so both
            # axes are sequential; no megacore sharding of this fused kernel.
            dimension_semantics=("arbitrary", "arbitrary"),
            vmem_limit_bytes=32 * 1024 * 1024,
        ),
        cost_estimate=cost,
    )(xb, adjb, w1, b1, w2, b2)

    return out_padded[:, :nout]


def init_params(key, nfeat, nhid, nout):
    k1, k2 = jax.random.split(key)

    def glorot(k, fan_in, fan_out):
        lim = (6.0 / (fan_in + fan_out)) ** 0.5
        return jax.random.uniform(k, (fan_in, fan_out), jnp.float32, -lim, lim)

    return {
        "w1": glorot(k1, nfeat, nhid),
        "b1": jnp.zeros((1, nhid), jnp.float32),
        "w2": glorot(k2, nhid, nout),
        "b2": jnp.zeros((1, nout), jnp.float32),
    }


if __name__ == "__main__":
    # Small shapes consistent with the module: N nodes, nfeat -> nhid -> nout.
    # N=256 with block_k=128 exercises the tiled reduction (2 column blocks).
    N, NFEAT, NHID, NOUT = 256, 32, 32, 16
    DROPOUT = 0.5

    key = jax.random.PRNGKey(0)
    kx, ka, kp = jax.random.split(key, 3)

    x = jax.random.normal(kx, (N, NFEAT), jnp.float32)

    # Symmetric row-normalized adjacency with self-loops (typical GCN input).
    a = (jax.random.uniform(ka, (N, N)) < 0.05).astype(jnp.float32)
    a = jnp.maximum(a, a.T) + jnp.eye(N, dtype=jnp.float32)
    adj = a / jnp.sum(a, axis=1, keepdims=True)

    params = init_params(kp, NFEAT, NHID, NOUT)

    out = gcn_forward(x, adj, params, dropout_rate=DROPOUT, training=False)
    out = jax.block_until_ready(out)

    # Pure f32 JAX reference (kernel uses bf16 inputs / f32 accumulation).
    ref_h = jnp.maximum(adj @ (x @ params["w1"]) + params["b1"], 0.0)
    ref = adj @ (ref_h @ params["w2"]) + params["b2"]
    assert out.shape == (N, NOUT)
    max_err = float(jnp.max(jnp.abs(out - ref)))
    assert jnp.allclose(out, ref, atol=2e-2, rtol=2e-2), f"max abs err {max_err}"

    print("KERNEL_OK")
</pallas_src>

<mosaic_0001>
module attributes {stable_mosaic.version = 11 : i64} {
  func.func @_fused_gcn_kernel(%arg0: i32, %arg1: i32, %arg2: memref<128x32xbf16, #tpu.memory_space<vmem>>, %arg3: memref<256x128xbf16, #tpu.memory_space<vmem>>, %arg4: memref<32x128xbf16, #tpu.memory_space<vmem>>, %arg5: memref<1x128xf32, #tpu.memory_space<vmem>>, %arg6: memref<128x128xbf16, #tpu.memory_space<vmem>>, %arg7: memref<1x128xf32, #tpu.memory_space<vmem>>, %arg8: memref<256x128xf32, #tpu.memory_space<vmem>>, %arg9: memref<256x128xf32, #tpu.memory_space<vmem>>, %arg10: memref<256x128xbf16, #tpu.memory_space<vmem>>) attributes {dimension_semantics = [#tpu.dimension_semantics<arbitrary>, #tpu.dimension_semantics<arbitrary>], iteration_bounds = array<i64: 2, 2>, scalar_prefetch = 0 : i64, scratch_operands = 2 : i64, tpu.core_type = #tpu.core_type<tc>, window_params = [{transform_indices = @transform_0, window_bounds = array<i64: 128, 32>}, {transform_indices = @transform_1, window_bounds = array<i64: 256, 128>}, {pipeline_mode = #tpu.pipeline_mode<synchronous>, transform_indices = @transform_2, window_bounds = array<i64: 32, 128>}, {pipeline_mode = #tpu.pipeline_mode<synchronous>, transform_indices = @transform_3, window_bounds = array<i64: 1, 128>}, {pipeline_mode = #tpu.pipeline_mode<synchronous>, transform_indices = @transform_4, window_bounds = array<i64: 128, 128>}, {pipeline_mode = #tpu.pipeline_mode<synchronous>, transform_indices = @transform_5, window_bounds = array<i64: 1, 128>}, {pipeline_mode = #tpu.pipeline_mode<synchronous>, transform_indices = @transform_6, window_bounds = array<i64: 256, 128>}]} {
    %c0_i32 = arith.constant 0 : i32
    %0 = arith.cmpi eq, %arg0, %c0_i32 : i32
    %c0_i32_0 = arith.constant 0 : i32
    %1 = arith.cmpi eq, %arg1, %c0_i32_0 : i32
    %2 = arith.andi %0, %1 : i1
    %3 = arith.extui %2 : i1 to i32
    %c0_i32_1 = arith.constant 0 : i32
    %4 = arith.cmpi ne, %3, %c0_i32_1 : i32
    scf.if %4 {
      %cst = arith.constant 0.000000e+00 : f32
      %21 = vector.broadcast %cst : f32 to vector<256x128xf32>
      %c0 = arith.constant 0 : index
      %c0_11 = arith.constant 0 : index
      %22 = vector.load %arg9[%c0, %c0_11] : memref<256x128xf32, #tpu.memory_space<vmem>>, vector<256x128xf32>
      tpu.vector_store %arg9[%c0, %c0_11], %21 {strides = array<i32>} : memref<256x128xf32, #tpu.memory_space<vmem>>, vector<256x128xf32>,
    } else {
    }
    %c0_i32_2 = arith.constant 0 : i32
    %5 = arith.cmpi eq, %arg0, %c0_i32_2 : i32
    %6 = arith.extui %5 : i1 to i32
    %c0_i32_3 = arith.constant 0 : i32
    %7 = arith.cmpi ne, %6, %c0_i32_3 : i32
    scf.if %7 {
      %c0 = arith.constant 0 : index
      %c0_11 = arith.constant 0 : index
      %21 = vector.load %arg2[%c0, %c0_11] : memref<128x32xbf16, #tpu.memory_space<vmem>>, vector<128x32xbf16>
      %c0_12 = arith.constant 0 : index
      %c0_13 = arith.constant 0 : index
      %22 = vector.load %arg4[%c0_12, %c0_13] : memref<32x128xbf16, #tpu.memory_space<vmem>>, vector<32x128xbf16>
      %cst = arith.constant dense<0.000000e+00> : vector<128x128xf32>
      %23 = tpu.matmul %21, %22, %cst {dimension_numbers = #tpu.dot_dimension_numbers<[1], [0], [0], [1], [0, 0, 1, 1], [], []>} : vector<128x32xbf16>, vector<32x128xbf16>, vector<128x128xf32> -> vector<128x128xf32>
      %c0_14 = arith.constant 0 : index
      %c0_15 = arith.constant 0 : index
      %24 = vector.load %arg9[%c0_14, %c0_15] : memref<256x128xf32, #tpu.memory_space<vmem>>, vector<256x128xf32>
      %c0_16 = arith.constant 0 : index
      %c0_17 = arith.constant 0 : index
      %25 = vector.load %arg3[%c0_16, %c0_17] : memref<256x128xbf16, #tpu.memory_space<vmem>>, vector<256x128xbf16>
      %26 = arith.truncf %23 : vector<128x128xf32> to vector<128x128xbf16>
      %cst_18 = arith.constant dense<0.000000e+00> : vector<256x128xf32>
      %27 = tpu.matmul %25, %26, %cst_18 {dimension_numbers = #tpu.dot_dimension_numbers<[1], [0], [0], [1], [0, 0, 1, 1], [], []>} : vector<256x128xbf16>, vector<128x128xbf16>, vector<256x128xf32> -> vector<256x128xf32>
      %28 = arith.addf %24, %27 : vector<256x128xf32>
      %c0_19 = arith.constant 0 : index
      %c0_20 = arith.constant 0 : index
      %29 = vector.load %arg9[%c0_19, %c0_20] : memref<256x128xf32, #tpu.memory_space<vmem>>, vector<256x128xf32>
      tpu.vector_store %arg9[%c0_19, %c0_20], %28 {strides = array<i32>} : memref<256x128xf32, #tpu.memory_space<vmem>>, vector<256x128xf32>,
    } else {
    }
    %c0_i32_4 = arith.constant 0 : i32
    %8 = arith.cmpi eq, %arg0, %c0_i32_4 : i32
    %c1_i32 = arith.constant 1 : i32
    %9 = arith.cmpi eq, %arg1, %c1_i32 : i32
    %10 = arith.andi %8, %9 : i1
    %11 = arith.extui %10 : i1 to i32
    %c0_i32_5 = arith.constant 0 : i32
    %12 = arith.cmpi ne, %11, %c0_i32_5 : i32
    scf.if %12 {
      %c0 = arith.constant 0 : index
      %c0_11 = arith.constant 0 : index
      %21 = vector.load %arg9[%c0, %c0_11] : memref<256x128xf32, #tpu.memory_space<vmem>>, vector<256x128xf32>
      %c0_12 = arith.constant 0 : index
      %c0_13 = arith.constant 0 : index
      %22 = vector.load %arg5[%c0_12, %c0_13] : memref<1x128xf32, #tpu.memory_space<vmem>>, vector<1x128xf32>
      %23 = vector.broadcast %22 : vector<1x128xf32> to vector<256x128xf32>
      %24 = arith.addf %21, %23 : vector<256x128xf32>
      %cst = arith.constant 0.000000e+00 : f32
      %25 = vector.broadcast %cst : f32 to vector<256x128xf32>
      %26 = arith.maximumf %24, %25 : vector<256x128xf32>
      %27 = arith.truncf %26 : vector<256x128xf32> to vector<256x128xbf16>
      %c0_14 = arith.constant 0 : index
      %c0_15 = arith.constant 0 : index
      %28 = vector.load %arg6[%c0_14, %c0_15] : memref<128x128xbf16, #tpu.memory_space<vmem>>, vector<128x128xbf16>
      %cst_16 = arith.constant dense<0.000000e+00> : vector<256x128xf32>
      %29 = tpu.matmul %27, %28, %cst_16 {dimension_numbers = #tpu.dot_dimension_numbers<[1], [0], [0], [1], [0, 0, 1, 1], [], []>} : vector<256x128xbf16>, vector<128x128xbf16>, vector<256x128xf32> -> vector<256x128xf32>
      %30 = arith.truncf %29 : vector<256x128xf32> to vector<256x128xbf16>
      %c0_17 = arith.constant 0 : index
      %c0_18 = arith.constant 0 : index
      %31 = vector.load %arg10[%c0_17, %c0_18] : memref<256x128xbf16, #tpu.memory_space<vmem>>, vector<256x128xbf16>
      tpu.vector_store %arg10[%c0_17, %c0_18], %30 {strides = array<i32>} : memref<256x128xbf16, #tpu.memory_space<vmem>>, vector<256x128xbf16>,
    } else {
    }
    %c1_i32_6 = arith.constant 1 : i32
    %13 = arith.cmpi eq, %arg0, %c1_i32_6 : i32
    %c0_i32_7 = arith.constant 0 : i32
    %14 = arith.cmpi eq, %arg1, %c0_i32_7 : i32
    %15 = arith.andi %13, %14 : i1
    %16 = arith.extui %15 : i1 to i32
    %c0_i32_8 = arith.constant 0 : i32
    %17 = arith.cmpi ne, %16, %c0_i32_8 : i32
    scf.if %17 {
      %c0 = arith.constant 0 : index
      %c0_11 = arith.constant 0 : index
      %21 = vector.load %arg7[%c0, %c0_11] : memref<1x128xf32, #tpu.memory_space<vmem>>, vector<1x128xf32>
      %22 = vector.shape_cast %21 : vector<1x128xf32> to vector<1x128xf32>
      %23 = vector.broadcast %22 : vector<1x128xf32> to vector<256x128xf32>
      %c0_12 = arith.constant 0 : index
      %c0_13 = arith.constant 0 : index
      %24 = vector.load %arg8[%c0_12, %c0_13] : memref<256x128xf32, #tpu.memory_space<vmem>>, vector<256x128xf32>
      tpu.vector_store %arg8[%c0_12, %c0_13], %23 {strides = array<i32>} : memref<256x128xf32, #tpu.memory_space<vmem>>, vector<256x128xf32>,
    } else {
    }
    %c1_i32_9 = arith.constant 1 : i32
    %18 = arith.cmpi eq, %arg0, %c1_i32_9 : i32
    %19 = arith.extui %18 : i1 to i32
    %c0_i32_10 = arith.constant 0 : i32
    %20 = arith.cmpi ne, %19, %c0_i32_10 : i32
    scf.if %20 {
      %c128_i32 = arith.constant 128 : i32
      %21 = arith.muli %arg1, %c128_i32 : i32
      %22 = tpu.assume_multiple %21, 128 : i32
      %23 = arith.index_cast %22 : i32 to index
      %c0 = arith.constant 0 : index
      %24 = vector.load %arg10[%23, %c0] : memref<256x128xbf16, #tpu.memory_space<vmem>>, vector<128x128xbf16>
      %c0_11 = arith.constant 0 : index
      %c0_12 = arith.constant 0 : index
      %25 = vector.load %arg8[%c0_11, %c0_12] : memref<256x128xf32, #tpu.memory_space<vmem>>, vector<256x128xf32>
      %c0_13 = arith.constant 0 : index
      %c0_14 = arith.constant 0 : index
      %26 = vector.load %arg3[%c0_13, %c0_14] : memref<256x128xbf16, #tpu.memory_space<vmem>>, vector<256x128xbf16>
      %cst = arith.constant dense<0.000000e+00> : vector<256x128xf32>
      %27 = tpu.matmul %26, %24, %cst {dimension_numbers = #tpu.dot_dimension_numbers<[1], [0], [0], [1], [0, 0, 1, 1], [], []>} : vector<256x128xbf16>, vector<128x128xbf16>, vector<256x128xf32> -> vector<256x128xf32>
      %28 = arith.addf %25, %27 : vector<256x128xf32>
      %c0_15 = arith.constant 0 : index
      %c0_16 = arith.constant 0 : index
      %29 = vector.load %arg8[%c0_15, %c0_16] : memref<256x128xf32, #tpu.memory_space<vmem>>, vector<256x128xf32>
      tpu.vector_store %arg8[%c0_15, %c0_16], %28 {strides = array<i32>} : memref<256x128xf32, #tpu.memory_space<vmem>>, vector<256x128xf32>,
    } else {
    }
    return
  }
  func.func @transform_0(%arg0: i32, %arg1: i32) -> (i32, i32) {
    %c1_i32 = arith.constant 1 : i32
    %0 = arith.subi %c1_i32, %arg0 : i32
    %1 = arith.muli %0, %arg1 : i32
    %c0_i32 = arith.constant 0 : i32
    %c0_i32_0 = arith.constant 0 : i32
    return %1, %c0_i32 : i32, i32
  }
  func.func @transform_1(%arg0: i32, %arg1: i32) -> (i32, i32) {
    %c0_i32 = arith.constant 0 : i32
    %c0_i32_0 = arith.constant 0 : i32
    return %c0_i32, %arg1 : i32, i32
  }
  func.func @transform_2(%arg0: i32, %arg1: i32) -> (i32, i32) {
    %c0_i32 = arith.constant 0 : i32
    %c0_i32_0 = arith.constant 0 : i32
    %c0_i32_1 = arith.constant 0 : i32
    return %c0_i32, %c0_i32_0 : i32, i32
  }
  func.func @transform_3(%arg0: i32, %arg1: i32) -> (i32, i32) {
    %c0_i32 = arith.constant 0 : i32
    %c0_i32_0 = arith.constant 0 : i32
    %c0_i32_1 = arith.constant 0 : i32
    return %c0_i32, %c0_i32_0 : i32, i32
  }
  func.func @transform_4(%arg0: i32, %arg1: i32) -> (i32, i32) {
    %c0_i32 = arith.constant 0 : i32
    %c0_i32_0 = arith.constant 0 : i32
    %c0_i32_1 = arith.constant 0 : i32
    return %c0_i32, %c0_i32_0 : i32, i32
  }
  func.func @transform_5(%arg0: i32, %arg1: i32) -> (i32, i32) {
    %c0_i32 = arith.constant 0 : i32
    %c0_i32_0 = arith.constant 0 : i32
    %c0_i32_1 = arith.constant 0 : i32
    return %c0_i32, %c0_i32_0 : i32, i32
  }
  func.func @transform_6(%arg0: i32, %arg1: i32) -> (i32, i32) {
    %c0_i32 = arith.constant 0 : i32
    %c0_i32_0 = arith.constant 0 : i32
    %c0_i32_1 = arith.constant 0 : i32
    return %c0_i32, %c0_i32_0 : i32, i32
  }
}

</mosaic_0001>

<llo_original>
// kernel: tpu_custom_call.1
$region0: #{tpu_custom_call.1}
  #allocation0 [shape = 'u32[]', space=smem, size = 0x4, offset = 0x4, fixed_abs, tag = 'smem constant byte address 0x4 - core index']
  #allocation1 [shape = 'u32[144,128]{1,0:T(1,128)}', space=vmem, size = 0x12000, scoped, tag = 'internal scratch']
  #allocation2 [shape = 'f32[256,128]{1,0:T(8,128)}', space=vmem, size = 0x20000, scoped, tag = 'scratch operand']
  #allocation3 [shape = 'bf16[256,128]{1,0:T(16,128)(2,1)}', space=vmem, size = 0x10000, scoped, tag = 'scratch operand']
  %s0 = inlined_call_operand.vmem [shape: bf16[256,32], index: 0, kind: input, shape index: {}]
  %s1 = inlined_call_operand.hbm [shape: bf16[256,256], index: 1, kind: input, shape index: {}]
  %s2 = inlined_call_operand.vmem [shape: bf16[32,128], index: 2, kind: input, shape index: {}]
  %s3 = inlined_call_operand.vmem [shape: f32[1,128], index: 3, kind: input, shape index: {}]
  %s4 = inlined_call_operand.vmem [shape: bf16[128,128], index: 4, kind: input, shape index: {}]
  %s5 = inlined_call_operand.vmem [shape: f32[1,128], index: 5, kind: input, shape index: {}]
  %s6 = inlined_call_operand.hbm [shape: f32[256,128], index: 6, kind: output, shape index: {}]
  %s7 = sld [smem:[#allocation0]]
  $region81: #{tpu_custom_call.1} parent=0
    _
  %s9 = ssub.s32 1, %s7
  %s10 = scalar_select 0, %s9, %s7
  $region1: #{tpu_custom_call.1} parent=0
    #allocation4 [shape = 'u8[131072]{0}', space=vmem, size = 0x20000, scoped, tag = 'input window, operand 1']
    #allocation5 [shape = 's32[2]{0}', space=sflag, size = 0x8, scoped, tag = 'scoped memory for tpu_custom_call.1']
    #allocation6 [shape = 's32[2]{0}', space=sflag, size = 0x8, scoped, tag = 'scoped memory for tpu_custom_call.1']
    #allocation7 [shape = 'u8[131072]{0}', space=vmem, size = 0x20000, scoped, tag = 'output window, operand 0, single buffered']
    %11 = vsyncpa [#allocation5], 0
    %s12 = scalar_lea.sflag [#allocation5], 1
    %13 = vsyncpa %s12, 0
    %14 = vsyncpa [#allocation6], 0
    loop: start=0, step=1, limit=6
    $region2: #{tpu_custom_call.1} parent=1 // loop_pre_header
      _
    $region3: #{tpu_custom_call.1} parent=1 // loop_header
      %s16 = sphi 0, %s20
      %p17 = scmp.ge.s32.totalorder %s16, 6
      %s23 = sphi 0, %s35
      %s24 = sphi 0, %s31
      %s25 = sphi 0, %s23
      %s26 = sphi 0, %s24
      %s27 = sphi 0, %s25
      %s28 = sphi 0, %s26
      %s42 = sphi 0, %s44
      %s45 = sphi 0, %s42
      %s46 = sphi 0, %s45
      %s62 = sphi 0, %s46
      %s68 = sphi 0, %s70
      %s71 = sphi 0, %s68
      %s72 = sphi 0, %s71
      %s88 = sphi 0, %s72
      %s92 = sphi 0, %s92
      %s94 = sphi 0, %s92
      %s95 = sphi 0, %s94
      %s109 = sphi 0, %s95
      %s113 = sphi 0, %s113
      %s115 = sphi 0, %s113
      %s116 = sphi 0, %s115
      %s130 = sphi 0, %s116
      %s134 = sphi 0, %s134
      %s136 = sphi 0, %s134
      %s137 = sphi 0, %s136
      %s151 = sphi 0, %s137
      %s155 = sphi 0, %s155
      %s157 = sphi 0, %s155
      %s158 = sphi 0, %s157
      %s172 = sphi 0, %s158
      %s176 = sphi 0, %s176
      %s178 = sphi 0, %s176
      %s179 = sphi 0, %s178
      %s193 = sphi 0, %s179
    $region4: #{tpu_custom_call.1} parent=1 // loop_header_branch
      %19 = sbr.rel (%p17) target = $region8
    $region5: #{tpu_custom_call.1} parent=1 // loop_body
      %s21 = ssub.s32 %s16, 1
      %s22 = ssub.s32 %s16, 2
      %s29 = sadd.s32 1, %s24
      %p30 = scmp.ge.s32.totalorder %s29, 2
      %s31 = scalar_select %p30, 0, %s29
      %s32 = sadd.s32 1, %s23
      %s33 = scalar_select %p30, %s32, %s23
      %p34 = scmp.ge.s32.totalorder %s33, 2
      %s35 = scalar_select %p34, 0, %s33
      %s36 = ssub.s32 1, %s23
      %s37 = smul.u32 %s36, %s24
      %s38 = ssub.s32 1, %s35
      %s39 = smul.u32 %s38, %s31
      %s40 = ssub.s32 %s37, %s39
      %p41 = scmp.eq.s32.totalorder %s40, 0
      %s43 = sadd.s32 %s42, 1
      %s44 = scalar_select %p41, %s42, %s43
      %p47 = pneg %p41
      %p48 = scmp.eq.s32.totalorder %s16, 3
      %p49 = por %p47, %p48
      %p50 = scmp.ne.s32.totalorder %s42, %s45
      %p51 = scmp.eq.s32.totalorder %s16, 0
      %p52 = por %p50, %p51
      %p53 = scmp.ne.s32.totalorder %s42, %s45
      %p54 = scmp.eq.s32.totalorder %s21, 3
      %p55 = por %p53, %p54
      %p56 = scmp.ne.s32.totalorder %s45, %s46
      %p57 = scmp.eq.s32.totalorder %s21, 0
      %p58 = por %p56, %p57
      %p59 = scmp.ne.s32.totalorder %s45, %s46
      %p60 = scmp.eq.s32.totalorder %s22, 3
      %p61 = por %p59, %p60
      %p63 = scmp.ne.s32.totalorder %s46, %s62
      %p64 = scmp.eq.s32.totalorder %s22, 0
      %p65 = por %p63, %p64
      %s66 = ssub.s32 %s24, %s31
      %p67 = scmp.eq.s32.totalorder %s66, 0
      %s69 = sadd.s32 %s68, 1
      %s70 = scalar_select %p67, %s68, %s69
      %p73 = pneg %p67
      %p74 = scmp.eq.s32.totalorder %s16, 3
      %p75 = por %p73, %p74
      %p76 = scmp.ne.s32.totalorder %s68, %s71
      %p77 = scmp.eq.s32.totalorder %s16, 0
      %p78 = por %p76, %p77
      %p79 = scmp.ne.s32.totalorder %s68, %s71
      %p80 = scmp.eq.s32.totalorder %s21, 3
      %p81 = por %p79, %p80
      %p82 = scmp.ne.s32.totalorder %s71, %s72
      %p83 = scmp.eq.s32.totalorder %s21, 0
      %p84 = por %p82, %p83
      %p85 = scmp.ne.s32.totalorder %s71, %s72
      %p86 = scmp.eq.s32.totalorder %s22, 3
      %p87 = por %p85, %p86
      %p89 = scmp.ne.s32.totalorder %s72, %s88
      %p90 = scmp.eq.s32.totalorder %s22, 0
      %p91 = por %p89, %p90
      %s93 = sadd.s32 %s92, 1
      %p96 = scmp.eq.s32.totalorder %s16, 3
      %p97 = scmp.ne.s32.totalorder %s92, %s94
      %p98 = scmp.eq.s32.totalorder %s16, 0
      %p99 = por %p97, %p98
      %p100 = scmp.ne.s32.totalorder %s92, %s94
      %p101 = scmp.eq.s32.totalorder %s21, 3
      %p102 = por %p100, %p101
      %p103 = scmp.ne.s32.totalorder %s94, %s95
      %p104 = scmp.eq.s32.totalorder %s21, 0
      %p105 = por %p103, %p104
      %p106 = scmp.ne.s32.totalorder %s94, %s95
      %p107 = scmp.eq.s32.totalorder %s22, 3
      %p108 = por %p106, %p107
      %p110 = scmp.ne.s32.totalorder %s95, %s109
      %p111 = scmp.eq.s32.totalorder %s22, 0
      %p112 = por %p110, %p111
      %s114 = sadd.s32 %s113, 1
      %p117 = scmp.eq.s32.totalorder %s16, 3
      %p118 = scmp.ne.s32.totalorder %s113, %s115
      %p119 = scmp.eq.s32.totalorder %s16, 0
      %p120 = por %p118, %p119
      %p121 = scmp.ne.s32.totalorder %s113, %s115
      %p122 = scmp.eq.s32.totalorder %s21, 3
      %p123 = por %p121, %p122
      %p124 = scmp.ne.s32.totalorder %s115, %s116
      %p125 = scmp.eq.s32.totalorder %s21, 0
      %p126 = por %p124, %p125
      %p127 = scmp.ne.s32.totalorder %s115, %s116
      %p128 = scmp.eq.s32.totalorder %s22, 3
      %p129 = por %p127, %p128
      %p131 = scmp.ne.s32.totalorder %s116, %s130
      %p132 = scmp.eq.s32.totalorder %s22, 0
      %p133 = por %p131, %p132
      %s135 = sadd.s32 %s134, 1
      %p138 = scmp.eq.s32.totalorder %s16, 3
      %p139 = scmp.ne.s32.totalorder %s134, %s136
      %p140 = scmp.eq.s32.totalorder %s16, 0
      %p141 = por %p139, %p140
      %p142 = scmp.ne.s32.totalorder %s134, %s136
      %p143 = scmp.eq.s32.totalorder %s21, 3
      %p144 = por %p142, %p143
      %p145 = scmp.ne.s32.totalorder %s136, %s137
      %p146 = scmp.eq.s32.totalorder %s21, 0
      %p147 = por %p145, %p146
      %p148 = scmp.ne.s32.totalorder %s136, %s137
      %p149 = scmp.eq.s32.totalorder %s22, 3
      %p150 = por %p148, %p149
      %p152 = scmp.ne.s32.totalorder %s137, %s151
      %p153 = scmp.eq.s32.totalorder %s22, 0
      %p154 = por %p152, %p153
      %s156 = sadd.s32 %s155, 1
      %p159 = scmp.eq.s32.totalorder %s16, 3
      %p160 = scmp.ne.s32.totalorder %s155, %s157
      %p161 = scmp.eq.s32.totalorder %s16, 0
      %p162 = por %p160, %p161
      %p163 = scmp.ne.s32.totalorder %s155, %s157
      %p164 = scmp.eq.s32.totalorder %s21, 3
      %p165 = por %p163, %p164
      %p166 = scmp.ne.s32.totalorder %s157, %s158
      %p167 = scmp.eq.s32.totalorder %s21, 0
      %p168 = por %p166, %p167
      %p169 = scmp.ne.s32.totalorder %s157, %s158
      %p170 = scmp.eq.s32.totalorder %s22, 3
      %p171 = por %p169, %p170
      %p173 = scmp.ne.s32.totalorder %s158, %s172
      %p174 = scmp.eq.s32.totalorder %s22, 0
      %p175 = por %p173, %p174
      %s177 = sadd.s32 %s176, 1
      %p180 = scmp.eq.s32.totalorder %s16, 3
      %p181 = scmp.ne.s32.totalorder %s176, %s178
      %p182 = scmp.eq.s32.totalorder %s16, 0
      %p183 = por %p181, %p182
      %p184 = scmp.ne.s32.totalorder %s176, %s178
      %p185 = scmp.eq.s32.totalorder %s21, 3
      %p186 = por %p184, %p185
      %p187 = scmp.ne.s32.totalorder %s178, %s179
      %p188 = scmp.eq.s32.totalorder %s21, 0
      %p189 = por %p187, %p188
      %p190 = scmp.ne.s32.totalorder %s178, %s179
      %p191 = scmp.eq.s32.totalorder %s22, 3
      %p192 = por %p190, %p191
      %p194 = scmp.ne.s32.totalorder %s179, %s193
      %p195 = scmp.eq.s32.totalorder %s22, 0
      %p196 = por %p194, %p195
      %p197 = scmp.le.s32.totalorder 1, %s16
      %p198 = scmp.lt.s32.totalorder %s16, 5
      %p199 = pnand %p197, %p198
      %p200 = pneg %p199
      // Predicated region
      $region9: #{tpu_custom_call.1} parent=5 // pred_check
        _
      $region10: #{tpu_custom_call.1} parent=5 // pred_check_branch
        %202 = sbr.rel (%p199) target = $region12
      $region11: #{tpu_custom_call.1} parent=5 // pred_region
        %s203 = ssub.s32 %s16, 1
        // Predicated region
        $region13: #{tpu_custom_call.1} parent=11 // pred_check
          %p204 = pneg %p105
        $region14: #{tpu_custom_call.1} parent=11 // pred_check_branch
          %206 = sbr.rel (%p204) target = $region16
        $region15: #{tpu_custom_call.1} parent=11 // pred_region
          _
        $region16: #{tpu_custom_call.1} parent=11 // pred_fallthru
          _
        // Predicated region
        $region17: #{tpu_custom_call.1} parent=11 // pred_check
          %p207 = pneg %p126
        $region18: #{tpu_custom_call.1} parent=11 // pred_check_branch
          %209 = sbr.rel (%p207) target = $region20
        $region19: #{tpu_custom_call.1} parent=11 // pred_region
          _
        $region20: #{tpu_custom_call.1} parent=11 // pred_fallthru
          _
        // Predicated region
        $region21: #{tpu_custom_call.1} parent=11 // pred_check
          %p210 = pneg %p147
        $region22: #{tpu_custom_call.1} parent=11 // pred_check_branch
          %212 = sbr.rel (%p210) target = $region24
        $region23: #{tpu_custom_call.1} parent=11 // pred_region
          _
        $region24: #{tpu_custom_call.1} parent=11 // pred_fallthru
          _
        // Predicated region
        $region25: #{tpu_custom_call.1} parent=11 // pred_check
          %p213 = pneg %p168
        $region26: #{tpu_custom_call.1} parent=11 // pred_check_branch
          %215 = sbr.rel (%p213) target = $region28
        $region27: #{tpu_custom_call.1} parent=11 // pred_region
          _
        $region28: #{tpu_custom_call.1} parent=11 // pred_fallthru
          _
      $region12: #{tpu_custom_call.1} parent=5 // pred_fallthru
        _
      %p216 = scmp.lt.s32.totalorder %s16, 4
      // Predicated region
      $region29: #{tpu_custom_call.1} parent=5 // pred_check
        %p217 = pneg %p216
      $region30: #{tpu_custom_call.1} parent=5 // pred_check_branch
        %219 = sbr.rel (%p217) target = $region32
      $region31: #{tpu_custom_call.1} parent=5 // pred_region
        // Predicated region
        $region33: #{tpu_custom_call.1} parent=31 // pred_check
          %p220 = pneg %p52
        $region34: #{tpu_custom_call.1} parent=31 // pred_check_branch
          %222 = sbr.rel (%p220) target = $region36
        $region35: #{tpu_custom_call.1} parent=31 // pred_region
          %s223 = ssub.s32 1, %s23
          %s224 = smul.u32 %s223, %s24
          %s225 = smul.u32 16, %s224
          %p226 = scmp.lt.s32.totalorder %s225, 31
          %s227 = scalar_select %p226, %s225, 31
          %s228 = smul.addr %s227, 4
          %s229 = scalar_lea.vmem %s0, %s228
          %s230 = ssub.s32 1, %s23
          %s231 = smul.u32 %s230, %s24
          %s232 = smul.u32 16, %s231
        $region36: #{tpu_custom_call.1} parent=31 // pred_fallthru
          _
        // Predicated region
        $region37: #{tpu_custom_call.1} parent=31 // pred_check
          %p233 = pneg %p78
        $region38: #{tpu_custom_call.1} parent=31 // pred_check_branch
          %235 = sbr.rel (%p233) target = $region40
        $region39: #{tpu_custom_call.1} parent=31 // pred_region
          %s236 = sand.u32 %s68, 1
          %s237 = scalar_lea.sflag [#allocation5], %s236
          %s238 = sand.u32 %s68, 1
          %s239 = smul.addr %s238, 128
          %s240 = scalar_lea.vmem [#allocation4], %s239
          %s242 = ssub.s32 2048, 2048
          %243 = vsyncadd %s237, %s242
          %s244 = smul.addr %s24, 64
          %s245 = scalar_lea.hbm %s1, %s244
          %s246 = sshll.u32 %s240, 4
          %s247 = int_to_ptr.vmem [resolvable:$true] %s246
          %252 = dma.hbm_to_vmem [thread:$0]  %s245, 2048, %s247, %s237, 128, 64, 4
        $region40: #{tpu_custom_call.1} parent=31 // pred_fallthru
          _
      $region32: #{tpu_custom_call.1} parent=5 // pred_fallthru
        _
      %p253 = scmp.le.s32.totalorder 1, %s16
      %p254 = scmp.lt.s32.totalorder %s16, 5
      %p255 = pnand %p253, %p254
      %p256 = pneg %p255
      // Predicated region
      $region41: #{tpu_custom_call.1} parent=5 // pred_check
        _
      $region42: #{tpu_custom_call.1} parent=5 // pred_check_branch
        %258 = sbr.rel (%p255) target = $region44
      $region43: #{tpu_custom_call.1} parent=5 // pred_region
        %s259 = ssub.s32 %s16, 1
        %s260 = sand.u32 %s71, 1
        %s261 = scalar_lea.sflag [#allocation5], %s260
        %s262 = sand.u32 %s71, 1
        %s263 = smul.addr %s262, 128
        %s264 = scalar_lea.vmem [#allocation4], %s263
        // Predicated region
        $region45: #{tpu_custom_call.1} parent=43 // pred_check
          %p265 = pneg %p84
        $region46: #{tpu_custom_call.1} parent=43 // pred_check_branch
          %267 = sbr.rel (%p265) target = $region48
        $region47: #{tpu_custom_call.1} parent=43 // pred_region
          %268 = dma.done %s261, 2048
        $region48: #{tpu_custom_call.1} parent=43 // pred_fallthru
          _
        %s269 = ssub.s32 1, %s25
        %s270 = smul.u32 %s269, %s26
        %s271 = smul.u32 16, %s270
        %p272 = scmp.lt.s32.totalorder %s271, 31
        %s273 = scalar_select %p272, %s271, 31
        %s274 = smul.addr %s273, 4
        %s275 = scalar_lea.vmem %s0, %s274
        %p276 = pneg %p58
        %p277 = pneg %p55
        %s278 = sand.u32 %s71, 1
        %s279 = scalar_lea.sflag [#allocation5], %s278
        %s280 = sand.u32 %s71, 1
        %s281 = smul.addr %s280, 128
        %s282 = scalar_lea.vmem [#allocation4], %s281
        %p283 = pneg %p84
        %p284 = pneg %p81
        %p285 = pneg %p105
        %p286 = pneg %p102
        %p287 = pneg %p126
        %p288 = pneg %p123
        %p289 = pneg %p147
        %p290 = pneg %p144
        %p291 = pneg %p168
        %p292 = pneg %p165
        %p293 = pneg %p189
        %p294 = pneg %p186
        %s295 = ssub.s32 1, %s25
        %s296 = smul.u32 %s295, %s26
        %s297 = smul.u32 16, %s296
        %p298 = scmp.lt.s32.totalorder %s297, 31
        %s299 = scalar_select %p298, %s297, 31
        %s300 = smul.addr %s299, 4
        %s301 = scalar_lea.vmem %s0, %s300
        %s302 = ssub.s32 1, %s25
        %s303 = smul.u32 %s302, %s26
        %s304 = smul.u32 16, %s303
        %p306 = scmp.eq.s32.totalorder %s25, 0
        %p307 = scmp.eq.s32.totalorder %s26, 0
        %p308 = pnand %p306, %p307
        %p309 = pneg %p308
        // Predicated region
        $region49: #{tpu_custom_call.1} parent=43 // pred_check
          _
        $region50: #{tpu_custom_call.1} parent=43 // pred_check_branch
          %311 = sbr.rel (%p308) target = $region52
        $region51: #{tpu_custom_call.1} parent=43 // pred_region
          %312 = vst [vmem:[#allocation2] sm:$0xff] 0.0
          %313 = vst [vmem:[#allocation2 + $0x8] sm:$0xff] 0.0
          %314 = vst [vmem:[#allocation2 + $0x10] sm:$0xff] 0.0
          %315 = vst [vmem:[#allocation2 + $0x18] sm:$0xff] 0.0
          %316 = vst [vmem:[#allocation2 + $0x20] sm:$0xff] 0.0
          %317 = vst [vmem:[#allocation2 + $0x28] sm:$0xff] 0.0
          %318 = vst [vmem:[#allocation2 + $0x30] sm:$0xff] 0.0
          %319 = vst [vmem:[#allocation2 + $0x38] sm:$0xff] 0.0
          %320 = vst [vmem:[#allocation2 + $0x40] sm:$0xff] 0.0
          %321 = vst [vmem:[#allocation2 + $0x48] sm:$0xff] 0.0
          %322 = vst [vmem:[#allocation2 + $0x50] sm:$0xff] 0.0
          %323 = vst [vmem:[#allocation2 + $0x58] sm:$0xff] 0.0
          %324 = vst [vmem:[#allocation2 + $0x60] sm:$0xff] 0.0
          %325 = vst [vmem:[#allocation2 + $0x68] sm:$0xff] 0.0
          %326 = vst [vmem:[#allocation2 + $0x70] sm:$0xff] 0.0
          %327 = vst [vmem:[#allocation2 + $0x78] sm:$0xff] 0.0
          %328 = vst [vmem:[#allocation2 + $0x80] sm:$0xff] 0.0
          %329 = vst [vmem:[#allocation2 + $0x88] sm:$0xff] 0.0
          %330 = vst [vmem:[#allocation2 + $0x90] sm:$0xff] 0.0
          %331 = vst [vmem:[#allocation2 + $0x98] sm:$0xff] 0.0
          %332 = vst [vmem:[#allocation2 + $0xa0] sm:$0xff] 0.0
          %333 = vst [vmem:[#allocation2 + $0xa8] sm:$0xff] 0.0
          %334 = vst [vmem:[#allocation2 + $0xb0] sm:$0xff] 0.0
          %335 = vst [vmem:[#allocation2 + $0xb8] sm:$0xff] 0.0
          %336 = vst [vmem:[#allocation2 + $0xc0] sm:$0xff] 0.0
          %337 = vst [vmem:[#allocation2 + $0xc8] sm:$0xff] 0.0
          %338 = vst [vmem:[#allocation2 + $0xd0] sm:$0xff] 0.0
          %339 = vst [vmem:[#allocation2 + $0xd8] sm:$0xff] 0.0
          %340 = vst [vmem:[#allocation2 + $0xe0] sm:$0xff] 0.0
          %341 = vst [vmem:[#allocation2 + $0xe8] sm:$0xff] 0.0
          %342 = vst [vmem:[#allocation2 + $0xf0] sm:$0xff] 0.0
          %343 = vst [vmem:[#allocation2 + $0xf8] sm:$0xff] 0.0
        $region52: #{tpu_custom_call.1} parent=43 // pred_fallthru
          _
        // Predicated region
        $region53: #{tpu_custom_call.1} parent=43 // pred_check
          %p344 = pneg %p306
        $region54: #{tpu_custom_call.1} parent=43 // pred_check_branch
          %346 = sbr.rel (%p344) target = $region56
        $region55: #{tpu_custom_call.1} parent=43 // pred_region
          %v347 = vld [vmem:[%s301] sm:$0xf]
          %v348 = vld [vmem:[%s301 + $0x4] sm:$0xf]
          %v349 = vld [vmem:[%s301 + $0x8] sm:$0xf]
          %v350 = vld [vmem:[%s301 + $0xc] sm:$0xf]
          %v351 = vld [vmem:[%s301 + $0x10] sm:$0xf]
          %v352 = vld [vmem:[%s301 + $0x14] sm:$0xf]
          %v353 = vld [vmem:[%s301 + $0x18] sm:$0xf]
          %v354 = vld [vmem:[%s301 + $0x1c] sm:$0xf]
          %v355 = vld [vmem:[%s301 + $0x20] sm:$0xf]
          %v356 = vld [vmem:[%s301 + $0x24] sm:$0xf]
          %v357 = vld [vmem:[%s301 + $0x28] sm:$0xf]
          %v358 = vld [vmem:[%s301 + $0x2c] sm:$0xf]
          %v359 = vld [vmem:[%s301 + $0x30] sm:$0xf]
          %v360 = vld [vmem:[%s301 + $0x34] sm:$0xf]
          %v361 = vld [vmem:[%s301 + $0x38] sm:$0xf]
          %v362 = vld [vmem:[%s301 + $0x3c] sm:$0xf]
          %v363 = vld [vmem:[%s2] sm:$0xf]
          %v364 = vld [vmem:[%s2 + $0x4] sm:$0xf]
          %v365 = vld [vmem:[%s2 + $0x8] sm:$0xf]
          %v366 = vld [vmem:[%s2 + $0xc] sm:$0xf]
          %v383 = vunpack.c.l.b16 %v347
          %v384 = vunpack.c.l.b16 %v348
          %v385 = vunpack.c.l.b16 %v349
          %v386 = vunpack.c.l.b16 %v350
          %v387 = vunpack.c.l.b16 %v351
          %v388 = vunpack.c.l.b16 %v352
          %v389 = vunpack.c.l.b16 %v353
          %v390 = vunpack.c.l.b16 %v354
          %v391 = vunpack.c.l.b16 %v355
          %v392 = vunpack.c.l.b16 %v356
          %v393 = vunpack.c.l.b16 %v357
          %v394 = vunpack.c.l.b16 %v358
          %v395 = vunpack.c.l.b16 %v359
          %v396 = vunpack.c.l.b16 %v360
          %v397 = vunpack.c.l.b16 %v361
          %v398 = vunpack.c.l.b16 %v362
          %v399 = vpack.c.b16 %v384, %v383
          %v400 = vpack.c.b16 %v386, %v385
          %v401 = vpack.c.b16 %v388, %v387
          %v402 = vpack.c.b16 %v390, %v389
          %v403 = vpack.c.b16 %v392, %v391
          %v404 = vpack.c.b16 %v394, %v393
          %v405 = vpack.c.b16 %v396, %v395
          %v406 = vpack.c.b16 %v398, %v397
          %v411 = vunpack.c.l.b16 %v363
          %v412 = vunpack.c.l.b16 %v364
          %v413 = vunpack.c.l.b16 %v365
          %v414 = vunpack.c.l.b16 %v366
          %v415 = vpack.c.b16 %v412, %v411
          %v416 = vpack.c.b16 %v414, %v413
          %vm419 = vcmask 261120
          %v421 = vsel %vm419, %v399, 0
          %v424 = vsel %vm419, %v400, 0
          %v427 = vsel %vm419, %v401, 0
          %v430 = vsel %vm419, %v402, 0
          %v433 = vsel %vm419, %v403, 0
          %v436 = vsel %vm419, %v404, 0
          %v439 = vsel %vm419, %v405, 0
          %v442 = vsel %vm419, %v406, 0
          %444 = vmatprep.subr.bf16.mxu0 0
          %445 = vmatpush1.bf16.msra.mxu0 %v415
          %446 = vmatprep.subr.bf16.mxu0 0
          %447 = vmatpush1.bf16.msra.mxu0 %v416
          %448 = vmatprep.subr.bf16.mxu0 0
          %449 = vmatpush1.bf16.msra.mxu0 0
          %450 = vmatprep.subr.bf16.mxu0 0
          %451 = vmatpush1.bf16.msra.mxu0 0
          %452 = vmatprep.subr.bf16.mxu0 0
          %453 = vmatpush1.bf16.msra.mxu0 0
          %454 = vmatprep.subr.bf16.mxu0 0
          %455 = vmatpush1.bf16.msra.mxu0 0
          %456 = vmatprep.subr.bf16.mxu0 0
          %457 = vmatpush1.bf16.msra.mxu0 0
          %458 = vmatprep.subr.bf16.mxu0 0
          %459 = vmatpush1.bf16.msra.mxu0 0
          %460 = vmatprep.subr.bf16.mxu0 0
          %461 = vmatpush1.bf16.msra.mxu0 0
          %462 = vmatprep.subr.bf16.mxu0 0
          %463 = vmatpush1.bf16.msra.mxu0 0
          %464 = vmatprep.subr.bf16.mxu0 0
          %465 = vmatpush1.bf16.msra.mxu0 0
          %466 = vmatprep.subr.bf16.mxu0 0
          %467 = vmatpush1.bf16.msra.mxu0 0
          %468 = vmatprep.subr.bf16.mxu0 0
          %469 = vmatpush1.bf16.msra.mxu0 0
          %470 = vmatprep.subr.bf16.mxu0 0
          %471 = vmatpush1.bf16.msra.mxu0 0
          %472 = vmatprep.subr.bf16.mxu0 0
          %473 = vmatpush1.bf16.msra.mxu0 0
          %474 = vmatprep.subr.bf16.mxu0 0
          %475 = vmatpush1.bf16.msra.mxu0 0
          %476 = vmatprep.mubr.bf16.mxu0 0
          %477 = vmatmul.mubr.bf16.gmra.mrb[0].mxu0 %v421
          %v478 = vpop.f32.mrb[0].mxu0
          %v479 = vadd.f32 0.0, %v478
          %v480 = vpop.f32.mrb[0].mxu0
          %v481 = vpop.f32.mrb[0].mxu0
          %v482 = vadd.f32 0.0, %v481
          %v483 = vpop.f32.mrb[0].mxu0
          %484 = vmatprep.mubr.bf16.mxu0 0
          %485 = vmatmul.mubr.bf16.gmra.mrb[0].mxu0 %v424
          %v486 = vpop.f32.mrb[0].mxu0
          %v487 = vadd.f32 0.0, %v486
          %v488 = vpop.f32.mrb[0].mxu0
          %v489 = vpop.f32.mrb[0].mxu0
          %v490 = vadd.f32 0.0, %v489
          %v491 = vpop.f32.mrb[0].mxu0
          %492 = vmatprep.mubr.bf16.mxu0 0
          %493 = vmatmul.mubr.bf16.gmra.mrb[0].mxu0 %v427
          %v494 = vpop.f32.mrb[0].mxu0
          %v495 = vadd.f32 0.0, %v494
          %v496 = vpop.f32.mrb[0].mxu0
          %v497 = vpop.f32.mrb[0].mxu0
          %v498 = vadd.f32 0.0, %v497
          %v499 = vpop.f32.mrb[0].mxu0
          %500 = vmatprep.mubr.bf16.mxu0 0
          %501 = vmatmul.mubr.bf16.gmra.mrb[0].mxu0 %v430
          %v502 = vpop.f32.mrb[0].mxu0
          %v503 = vadd.f32 0.0, %v502
          %v504 = vpop.f32.mrb[0].mxu0
          %v505 = vpop.f32.mrb[0].mxu0
          %v506 = vadd.f32 0.0, %v505
          %v507 = vpop.f32.mrb[0].mxu0
          %508 = vmatprep.mubr.bf16.mxu0 0
          %509 = vmatmul.mubr.bf16.gmra.mrb[0].mxu0 %v433
          %v510 = vpop.f32.mrb[0].mxu0
          %v511 = vadd.f32 0.0, %v510
          %v512 = vpop.f32.mrb[0].mxu0
          %v513 = vpop.f32.mrb[0].mxu0
          %v514 = vadd.f32 0.0, %v513
          %v515 = vpop.f32.mrb[0].mxu0
          %516 = vmatprep.mubr.bf16.mxu0 0
          %517 = vmatmul.mubr.bf16.gmra.mrb[0].mxu0 %v436
          %v518 = vpop.f32.mrb[0].mxu0
          %v519 = vadd.f32 0.0, %v518
          %v520 = vpop.f32.mrb[0].mxu0
          %v521 = vpop.f32.mrb[0].mxu0
          %v522 = vadd.f32 0.0, %v521
          %v523 = vpop.f32.mrb[0].mxu0
          %524 = vmatprep.mubr.bf16.mxu0 0
          %525 = vmatmul.mubr.bf16.gmra.mrb[0].mxu0 %v439
          %v526 = vpop.f32.mrb[0].mxu0
          %v527 = vadd.f32 0.0, %v526
          %v528 = vpop.f32.mrb[0].mxu0
          %v529 = vpop.f32.mrb[0].mxu0
          %v530 = vadd.f32 0.0, %v529
          %v531 = vpop.f32.mrb[0].mxu0
          %532 = vmatprep.mubr.bf16.mxu0 0
          %533 = vmatmul.mubr.bf16.gmra.mrb[0].mxu0 %v442
          %v534 = vpop.f32.mrb[0].mxu0
          %v535 = vadd.f32 0.0, %v534
          %v536 = vpop.f32.mrb[0].mxu0
          %v537 = vpop.f32.mrb[0].mxu0
          %v538 = vadd.f32 0.0, %v537
          %v539 = vpop.f32.mrb[0].mxu0
          %540 = vdwg.mxu0
          %v541 = vld [vmem:[#allocation2] sm:$0xff]
          %v542 = vld [vmem:[#allocation2 + $0x8] sm:$0xff]
          %v543 = vld [vmem:[#allocation2 + $0x10] sm:$0xff]
          %v544 = vld [vmem:[#allocation2 + $0x18] sm:$0xff]
          %v545 = vld [vmem:[#allocation2 + $0x20] sm:$0xff]
          %v546 = vld [vmem:[#allocation2 + $0x28] sm:$0xff]
          %v547 = vld [vmem:[#allocation2 + $0x30] sm:$0xff]
          %v548 = vld [vmem:[#allocation2 + $0x38] sm:$0xff]
          %v549 = vld [vmem:[#allocation2 + $0x40] sm:$0xff]
          %v550 = vld [vmem:[#allocation2 + $0x48] sm:$0xff]
          %v551 = vld [vmem:[#allocation2 + $0x50] sm:$0xff]
          %v552 = vld [vmem:[#allocation2 + $0x58] sm:$0xff]
          %v553 = vld [vmem:[#allocation2 + $0x60] sm:$0xff]
          %v554 = vld [vmem:[#allocation2 + $0x68] sm:$0xff]
          %v555 = vld [vmem:[#allocation2 + $0x70] sm:$0xff]
          %v556 = vld [vmem:[#allocation2 + $0x78] sm:$0xff]
          %v557 = vld [vmem:[#allocation2 + $0x80] sm:$0xff]
          %v558 = vld [vmem:[#allocation2 + $0x88] sm:$0xff]
          %v559 = vld [vmem:[#allocation2 + $0x90] sm:$0xff]
          %v560 = vld [vmem:[#allocation2 + $0x98] sm:$0xff]
          %v561 = vld [vmem:[#allocation2 + $0xa0] sm:$0xff]
          %v562 = vld [vmem:[#allocation2 + $0xa8] sm:$0xff]
          %v563 = vld [vmem:[#allocation2 + $0xb0] sm:$0xff]
          %v564 = vld [vmem:[#allocation2 + $0xb8] sm:$0xff]
          %v565 = vld [vmem:[#allocation2 + $0xc0] sm:$0xff]
          %v566 = vld [vmem:[#allocation2 + $0xc8] sm:$0xff]
          %v567 = vld [vmem:[#allocation2 + $0xd0] sm:$0xff]
          %v568 = vld [vmem:[#allocation2 + $0xd8] sm:$0xff]
          %v569 = vld [vmem:[#allocation2 + $0xe0] sm:$0xff]
          %v570 = vld [vmem:[#allocation2 + $0xe8] sm:$0xff]
          %v571 = vld [vmem:[#allocation2 + $0xf0] sm:$0xff]
          %v572 = vld [vmem:[#allocation2 + $0xf8] sm:$0xff]
          %v573 = vld [vmem:[%s264] sm:$0xf]
          %v574 = vld [vmem:[%s264 + $0x4] sm:$0xf]
          %v575 = vld [vmem:[%s264 + $0x8] sm:$0xf]
          %v576 = vld [vmem:[%s264 + $0xc] sm:$0xf]
          %v577 = vld [vmem:[%s264 + $0x10] sm:$0xf]
          %v578 = vld [vmem:[%s264 + $0x14] sm:$0xf]
          %v579 = vld [vmem:[%s264 + $0x18] sm:$0xf]
          %v580 = vld [vmem:[%s264 + $0x1c] sm:$0xf]
          %v581 = vld [vmem:[%s264 + $0x20] sm:$0xf]
          %v582 = vld [vmem:[%s264 + $0x24] sm:$0xf]
          %v583 = vld [vmem:[%s264 + $0x28] sm:$0xf]
          %v584 = vld [vmem:[%s264 + $0x2c] sm:$0xf]
          %v585 = vld [vmem:[%s264 + $0x30] sm:$0xf]
          %v586 = vld [vmem:[%s264 + $0x34] sm:$0xf]
          %v587 = vld [vmem:[%s264 + $0x38] sm:$0xf]
          %v588 = vld [vmem:[%s264 + $0x3c] sm:$0xf]
          %v589 = vld [vmem:[%s264 + $0x40] sm:$0xf]
          %v590 = vld [vmem:[%s264 + $0x44] sm:$0xf]
          %v591 = vld [vmem:[%s264 + $0x48] sm:$0xf]
          %v592 = vld [vmem:[%s264 + $0x4c] sm:$0xf]
          %v593 = vld [vmem:[%s264 + $0x50] sm:$0xf]
          %v594 = vld [vmem:[%s264 + $0x54] sm:$0xf]
          %v595 = vld [vmem:[%s264 + $0x58] sm:$0xf]
          %v596 = vld [vmem:[%s264 + $0x5c] sm:$0xf]
          %v597 = vld [vmem:[%s264 + $0x60] sm:$0xf]
          %v598 = vld [vmem:[%s264 + $0x64] sm:$0xf]
          %v599 = vld [vmem:[%s264 + $0x68] sm:$0xf]
          %v600 = vld [vmem:[%s264 + $0x6c] sm:$0xf]
          %v601 = vld [vmem:[%s264 + $0x70] sm:$0xf]
          %v602 = vld [vmem:[%s264 + $0x74] sm:$0xf]
          %v603 = vld [vmem:[%s264 + $0x78] sm:$0xf]
          %v604 = vld [vmem:[%s264 + $0x7c] sm:$0xf]
          %v605 = vpack.c.bf16 %v482, %v479
          %v606 = vpack.c.bf16 %v490, %v487
          %v607 = vpack.c.bf16 %v498, %v495
          %v608 = vpack.c.bf16 %v506, %v503
          %v609 = vpack.c.bf16 %v514, %v511
          %v610 = vpack.c.bf16 %v522, %v519
          %v611 = vpack.c.bf16 %v530, %v527
          %v612 = vpack.c.bf16 %v538, %v535
          %v645 = vunpack.c.l.b16 %v573
          %v646 = vunpack.c.l.b16 %v574
          %v647 = vunpack.c.l.b16 %v575
          %v648 = vunpack.c.l.b16 %v576
          %v649 = vunpack.c.l.b16 %v577
          %v650 = vunpack.c.l.b16 %v578
          %v651 = vunpack.c.l.b16 %v579
          %v652 = vunpack.c.l.b16 %v580
          %v653 = vunpack.c.l.b16 %v581
          %v654 = vunpack.c.l.b16 %v582
          %v655 = vunpack.c.l.b16 %v583
          %v656 = vunpack.c.l.b16 %v584
          %v657 = vunpack.c.l.b16 %v585
          %v658 = vunpack.c.l.b16 %v586
          %v659 = vunpack.c.l.b16 %v587
          %v660 = vunpack.c.l.b16 %v588
          %v661 = vunpack.c.l.b16 %v589
          %v662 = vunpack.c.l.b16 %v590
          %v663 = vunpack.c.l.b16 %v591
          %v664 = vunpack.c.l.b16 %v592
          %v665 = vunpack.c.l.b16 %v593
          %v666 = vunpack.c.l.b16 %v594
          %v667 = vunpack.c.l.b16 %v595
          %v668 = vunpack.c.l.b16 %v596
          %v669 = vunpack.c.l.b16 %v597
          %v670 = vunpack.c.l.b16 %v598
          %v671 = vunpack.c.l.b16 %v599
          %v672 = vunpack.c.l.b16 %v600
          %v673 = vunpack.c.l.b16 %v601
          %v674 = vunpack.c.l.b16 %v602
          %v675 = vunpack.c.l.b16 %v603
          %v676 = vunpack.c.l.b16 %v604
          %v677 = vpack.c.b16 %v646, %v645
          %v678 = vpack.c.b16 %v648, %v647
          %v679 = vpack.c.b16 %v650, %v649
          %v680 = vpack.c.b16 %v652, %v651
          %v681 = vpack.c.b16 %v654, %v653
          %v682 = vpack.c.b16 %v656, %v655
          %v683 = vpack.c.b16 %v658, %v657
          %v684 = vpack.c.b16 %v660, %v659
          %v685 = vpack.c.b16 %v662, %v661
          %v686 = vpack.c.b16 %v664, %v663
          %v687 = vpack.c.b16 %v666, %v665
          %v688 = vpack.c.b16 %v668, %v667
          %v689 = vpack.c.b16 %v670, %v669
          %v690 = vpack.c.b16 %v672, %v671
          %v691 = vpack.c.b16 %v674, %v673
          %v692 = vpack.c.b16 %v676, %v675
          %709 = vmatprep.subr.bf16.mxu0 0
          %710 = vmatpush1.bf16.msra.mxu0 %v605
          %711 = vmatprep.subr.bf16.mxu0 0
          %712 = vmatpush1.bf16.msra.mxu0 %v606
          %713 = vmatprep.subr.bf16.mxu0 0
          %714 = vmatpush1.bf16.msra.mxu0 %v607
          %715 = vmatprep.subr.bf16.mxu0 0
          %716 = vmatpush1.bf16.msra.mxu0 %v608
          %717 = vmatprep.subr.bf16.mxu0 0
          %718 = vmatpush1.bf16.msra.mxu0 %v609
          %719 = vmatprep.subr.bf16.mxu0 0
          %720 = vmatpush1.bf16.msra.mxu0 %v610
          %721 = vmatprep.subr.bf16.mxu0 0
          %722 = vmatpush1.bf16.msra.mxu0 %v611
          %723 = vmatprep.subr.bf16.mxu0 0
          %724 = vmatpush1.bf16.msra.mxu0 %v612
          %725 = vmatprep.subr.bf16.mxu0 0
          %726 = vmatpush1.bf16.msra.mxu0 0
          %727 = vmatprep.subr.bf16.mxu0 0
          %728 = vmatpush1.bf16.msra.mxu0 0
          %729 = vmatprep.subr.bf16.mxu0 0
          %730 = vmatpush1.bf16.msra.mxu0 0
          %731 = vmatprep.subr.bf16.mxu0 0
          %732 = vmatpush1.bf16.msra.mxu0 0
          %733 = vmatprep.subr.bf16.mxu0 0
          %734 = vmatpush1.bf16.msra.mxu0 0
          %735 = vmatprep.subr.bf16.mxu0 0
          %736 = vmatpush1.bf16.msra.mxu0 0
          %737 = vmatprep.subr.bf16.mxu0 0
          %738 = vmatpush1.bf16.msra.mxu0 0
          %739 = vmatprep.subr.bf16.mxu0 0
          %740 = vmatpush1.bf16.msra.mxu0 0
          %741 = vmatprep.mubr.bf16.mxu0 0
          %742 = vmatmul.mubr.bf16.gmra.mrb[0].mxu0 %v677
          %v743 = vpop.f32.mrb[0].mxu0
          %v744 = vadd.f32 0.0, %v743
          %v745 = vpop.f32.mrb[0].mxu0
          %v746 = vpop.f32.mrb[0].mxu0
          %v747 = vadd.f32 0.0, %v746
          %v748 = vpop.f32.mrb[0].mxu0
          %749 = vmatprep.mubr.bf16.mxu0 0
          %750 = vmatmul.mubr.bf16.gmra.mrb[0].mxu0 %v678
          %v751 = vpop.f32.mrb[0].mxu0
          %v752 = vadd.f32 0.0, %v751
          %v753 = vpop.f32.mrb[0].mxu0
          %v754 = vpop.f32.mrb[0].mxu0
          %v755 = vadd.f32 0.0, %v754
          %v756 = vpop.f32.mrb[0].mxu0
          %757 = vmatprep.mubr.bf16.mxu0 0
          %758 = vmatmul.mubr.bf16.gmra.mrb[0].mxu0 %v679
          %v759 = vpop.f32.mrb[0].mxu0
          %v760 = vadd.f32 0.0, %v759
          %v761 = vpop.f32.mrb[0].mxu0
          %v762 = vpop.f32.mrb[0].mxu0
          %v763 = vadd.f32 0.0, %v762
          %v764 = vpop.f32.mrb[0].mxu0
          %765 = vmatprep.mubr.bf16.mxu0 0
          %766 = vmatmul.mubr.bf16.gmra.mrb[0].mxu0 %v680
          %v767 = vpop.f32.mrb[0].mxu0
          %v768 = vadd.f32 0.0, %v767
          %v769 = vpop.f32.mrb[0].mxu0
          %v770 = vpop.f32.mrb[0].mxu0
          %v771 = vadd.f32 0.0, %v770
          %v772 = vpop.f32.mrb[0].mxu0
          %773 = vmatprep.mubr.bf16.mxu0 0
          %774 = vmatmul.mubr.bf16.gmra.mrb[0].mxu0 %v681
          %v775 = vpop.f32.mrb[0].mxu0
          %v776 = vadd.f32 0.0, %v775
          %v777 = vpop.f32.mrb[0].mxu0
          %v778 = vpop.f32.mrb[0].mxu0
          %v779 = vadd.f32 0.0, %v778
          %v780 = vpop.f32.mrb[0].mxu0
          %781 = vmatprep.mubr.bf16.mxu0 0
          %782 = vmatmul.mubr.bf16.gmra.mrb[0].mxu0 %v682
          %v783 = vpop.f32.mrb[0].mxu0
          %v784 = vadd.f32 0.0, %v783
          %v785 = vpop.f32.mrb[0].mxu0
          %v786 = vpop.f32.mrb[0].mxu0
          %v787 = vadd.f32 0.0, %v786
          %v788 = vpop.f32.mrb[0].mxu0
          %789 = vmatprep.mubr.bf16.mxu0 0
          %790 = vmatmul.mubr.bf16.gmra.mrb[0].mxu0 %v683
          %v791 = vpop.f32.mrb[0].mxu0
          %v792 = vadd.f32 0.0, %v791
          %v793 = vpop.f32.mrb[0].mxu0
          %v794 = vpop.f32.mrb[0].mxu0
          %v795 = vadd.f32 0.0, %v794
          %v796 = vpop.f32.mrb[0].mxu0
          %797 = vmatprep.mubr.bf16.mxu0 0
          %798 = vmatmul.mubr.bf16.gmra.mrb[0].mxu0 %v684
          %v799 = vpop.f32.mrb[0].mxu0
          %v800 = vadd.f32 0.0, %v799
          %v801 = vpop.f32.mrb[0].mxu0
          %v802 = vpop.f32.mrb[0].mxu0
          %v803 = vadd.f32 0.0, %v802
          %v804 = vpop.f32.mrb[0].mxu0
          %805 = vmatprep.mubr.bf16.mxu0 0
          %806 = vmatmul.mubr.bf16.gmra.mrb[0].mxu0 %v685
          %v807 = vpop.f32.mrb[0].mxu0
          %v808 = vadd.f32 0.0, %v807
          %v809 = vpop.f32.mrb[0].mxu0
          %v810 = vpop.f32.mrb[0].mxu0
          %v811 = vadd.f32 0.0, %v810
          %v812 = vpop.f32.mrb[0].mxu0
          %813 = vmatprep.mubr.bf16.mxu0 0
          %814 = vmatmul.mubr.bf16.gmra.mrb[0].mxu0 %v686
          %v815 = vpop.f32.mrb[0].mxu0
          %v816 = vadd.f32 0.0, %v815
          %v817 = vpop.f32.mrb[0].mxu0
          %v818 = vpop.f32.mrb[0].mxu0
          %v819 = vadd.f32 0.0, %v818
          %v820 = vpop.f32.mrb[0].mxu0
          %821 = vmatprep.mubr.bf16.mxu0 0
          %822 = vmatmul.mubr.bf16.gmra.mrb[0].mxu0 %v687
          %v823 = vpop.f32.mrb[0].mxu0
          %v824 = vadd.f32 0.0, %v823
          %v825 = vpop.f32.mrb[0].mxu0
          %v826 = vpop.f32.mrb[0].mxu0
          %v827 = vadd.f32 0.0, %v826
          %v828 = vpop.f32.mrb[0].mxu0
          %829 = vmatprep.mubr.bf16.mxu0 0
          %830 = vmatmul.mubr.bf16.gmra.mrb[0].mxu0 %v688
          %v831 = vpop.f32.mrb[0].mxu0
          %v832 = vadd.f32 0.0, %v831
          %v833 = vpop.f32.mrb[0].mxu0
          %v834 = vpop.f32.mrb[0].mxu0
          %v835 = vadd.f32 0.0, %v834
          %v836 = vpop.f32.mrb[0].mxu0
          %837 = vmatprep.mubr.bf16.mxu0 0
          %838 = vmatmul.mubr.bf16.gmra.mrb[0].mxu0 %v689
          %v839 = vpop.f32.mrb[0].mxu0
          %v840 = vadd.f32 0.0, %v839
          %v841 = vpop.f32.mrb[0].mxu0
          %v842 = vpop.f32.mrb[0].mxu0
          %v843 = vadd.f32 0.0, %v842
          %v844 = vpop.f32.mrb[0].mxu0
          %845 = vmatprep.mubr.bf16.mxu0 0
          %846 = vmatmul.mubr.bf16.gmra.mrb[0].mxu0 %v690
          %v847 = vpop.f32.mrb[0].mxu0
          %v848 = vadd.f32 0.0, %v847
          %v849 = vpop.f32.mrb[0].mxu0
          %v850 = vpop.f32.mrb[0].mxu0
          %v851 = vadd.f32 0.0, %v850
          %v852 = vpop.f32.mrb[0].mxu0
          %853 = vmatprep.mubr.bf16.mxu0 0
          %854 = vmatmul.mubr.bf16.gmra.mrb[0].mxu0 %v691
          %v855 = vpop.f32.mrb[0].mxu0
          %v856 = vadd.f32 0.0, %v855
          %v857 = vpop.f32.mrb[0].mxu0
          %v858 = vpop.f32.mrb[0].mxu0
          %v859 = vadd.f32 0.0, %v858
          %v860 = vpop.f32.mrb[0].mxu0
          %861 = vmatprep.mubr.bf16.mxu0 0
          %862 = vmatmul.mubr.bf16.gmra.mrb[0].mxu0 %v692
          %v863 = vpop.f32.mrb[0].mxu0
          %v864 = vadd.f32 0.0, %v863
          %v865 = vpop.f32.mrb[0].mxu0
          %v866 = vpop.f32.mrb[0].mxu0
          %v867 = vadd.f32 0.0, %v866
          %v868 = vpop.f32.mrb[0].mxu0
          %869 = vdwg.mxu0
          %v870 = vadd.f32 %v541, %v744
          %v871 = vadd.f32 %v542, %v747
          %v872 = vadd.f32 %v543, %v752
          %v873 = vadd.f32 %v544, %v755
          %v874 = vadd.f32 %v545, %v760
          %v875 = vadd.f32 %v546, %v763
          %v876 = vadd.f32 %v547, %v768
          %v877 = vadd.f32 %v548, %v771
          %v878 = vadd.f32 %v549, %v776
          %v879 = vadd.f32 %v550, %v779
          %v880 = vadd.f32 %v551, %v784
          %v881 = vadd.f32 %v552, %v787
          %v882 = vadd.f32 %v553, %v792
          %v883 = vadd.f32 %v554, %v795
          %v884 = vadd.f32 %v555, %v800
          %v885 = vadd.f32 %v556, %v803
          %v886 = vadd.f32 %v557, %v808
          %v887 = vadd.f32 %v558, %v811
          %v888 = vadd.f32 %v559, %v816
          %v889 = vadd.f32 %v560, %v819
          %v890 = vadd.f32 %v561, %v824
          %v891 = vadd.f32 %v562, %v827
          %v892 = vadd.f32 %v563, %v832
          %v893 = vadd.f32 %v564, %v835
          %v894 = vadd.f32 %v565, %v840
          %v895 = vadd.f32 %v566, %v843
          %v896 = vadd.f32 %v567, %v848
          %v897 = vadd.f32 %v568, %v851
          %v898 = vadd.f32 %v569, %v856
          %v899 = vadd.f32 %v570, %v859
          %v900 = vadd.f32 %v571, %v864
          %v901 = vadd.f32 %v572, %v867
          %902 = vst [vmem:[#allocation2] sm:$0xff] %v870
          %903 = vst [vmem:[#allocation2 + $0x8] sm:$0xff] %v871
          %904 = vst [vmem:[#allocation2 + $0x10] sm:$0xff] %v872
          %905 = vst [vmem:[#allocation2 + $0x18] sm:$0xff] %v873
          %906 = vst [vmem:[#allocation2 + $0x20] sm:$0xff] %v874
          %907 = vst [vmem:[#allocation2 + $0x28] sm:$0xff] %v875
          %908 = vst [vmem:[#allocation2 + $0x30] sm:$0xff] %v876
          %909 = vst [vmem:[#allocation2 + $0x38] sm:$0xff] %v877
          %910 = vst [vmem:[#allocation2 + $0x40] sm:$0xff] %v878
          %911 = vst [vmem:[#allocation2 + $0x48] sm:$0xff] %v879
          %912 = vst [vmem:[#allocation2 + $0x50] sm:$0xff] %v880
          %913 = vst [vmem:[#allocation2 + $0x58] sm:$0xff] %v881
          %914 = vst [vmem:[#allocation2 + $0x60] sm:$0xff] %v882
          %915 = vst [vmem:[#allocation2 + $0x68] sm:$0xff] %v883
          %916 = vst [vmem:[#allocation2 + $0x70] sm:$0xff] %v884
          %917 = vst [vmem:[#allocation2 + $0x78] sm:$0xff] %v885
          %918 = vst [vmem:[#allocation2 + $0x80] sm:$0xff] %v886
          %919 = vst [vmem:[#allocation2 + $0x88] sm:$0xff] %v887
          %920 = vst [vmem:[#allocation2 + $0x90] sm:$0xff] %v888
          %921 = vst [vmem:[#allocation2 + $0x98] sm:$0xff] %v889
          %922 = vst [vmem:[#allocation2 + $0xa0] sm:$0xff] %v890
          %923 = vst [vmem:[#allocation2 + $0xa8] sm:$0xff] %v891
          %924 = vst [vmem:[#allocation2 + $0xb0] sm:$0xff] %v892
          %925 = vst [vmem:[#allocation2 + $0xb8] sm:$0xff] %v893
          %926 = vst [vmem:[#allocation2 + $0xc0] sm:$0xff] %v894
          %927 = vst [vmem:[#allocation2 + $0xc8] sm:$0xff] %v895
          %928 = vst [vmem:[#allocation2 + $0xd0] sm:$0xff] %v896
          %929 = vst [vmem:[#allocation2 + $0xd8] sm:$0xff] %v897
          %930 = vst [vmem:[#allocation2 + $0xe0] sm:$0xff] %v898
          %931 = vst [vmem:[#allocation2 + $0xe8] sm:$0xff] %v899
          %932 = vst [vmem:[#allocation2 + $0xf0] sm:$0xff] %v900
          %933 = vst [vmem:[#allocation2 + $0xf8] sm:$0xff] %v901
        $region56: #{tpu_custom_call.1} parent=43 // pred_fallthru
          _
        %p934 = scmp.eq.s32.totalorder %s26, 1
        %p935 = pnand %p306, %p934
        %p936 = pneg %p935
        // Predicated region
        $region57: #{tpu_custom_call.1} parent=43 // pred_check
          _
        $region58: #{tpu_custom_call.1} parent=43 // pred_check_branch
          %938 = sbr.rel (%p935) target = $region60
        $region59: #{tpu_custom_call.1} parent=43 // pred_region
          %v939 = vld [vmem:[#allocation2] sm:$0xff]
          %v940 = vld [vmem:[#allocation2 + $0x8] sm:$0xff]
          %v941 = vld [vmem:[#allocation2 + $0x10] sm:$0xff]
          %v942 = vld [vmem:[#allocation2 + $0x18] sm:$0xff]
          %v943 = vld [vmem:[#allocation2 + $0x20] sm:$0xff]
          %v944 = vld [vmem:[#allocation2 + $0x28] sm:$0xff]
          %v945 = vld [vmem:[#allocation2 + $0x30] sm:$0xff]
          %v946 = vld [vmem:[#allocation2 + $0x38] sm:$0xff]
          %v947 = vld [vmem:[#allocation2 + $0x40] sm:$0xff]
          %v948 = vld [vmem:[#allocation2 + $0x48] sm:$0xff]
          %v949 = vld [vmem:[#allocation2 + $0x50] sm:$0xff]
          %v950 = vld [vmem:[#allocation2 + $0x58] sm:$0xff]
          %v951 = vld [vmem:[#allocation2 + $0x60] sm:$0xff]
          %v952 = vld [vmem:[#allocation2 + $0x68] sm:$0xff]
          %v953 = vld [vmem:[#allocation2 + $0x70] sm:$0xff]
          %v954 = vld [vmem:[#allocation2 + $0x78] sm:$0xff]
          %v955 = vld [vmem:[#allocation2 + $0x80] sm:$0xff]
          %v956 = vld [vmem:[#allocation2 + $0x88] sm:$0xff]
          %v957 = vld [vmem:[#allocation2 + $0x90] sm:$0xff]
          %v958 = vld [vmem:[#allocation2 + $0x98] sm:$0xff]
          %v959 = vld [vmem:[#allocation2 + $0xa0] sm:$0xff]
          %v960 = vld [vmem:[#allocation2 + $0xa8] sm:$0xff]
          %v961 = vld [vmem:[#allocation2 + $0xb0] sm:$0xff]
          %v962 = vld [vmem:[#allocation2 + $0xb8] sm:$0xff]
          %v963 = vld [vmem:[#allocation2 + $0xc0] sm:$0xff]
          %v964 = vld [vmem:[#allocation2 + $0xc8] sm:$0xff]
          %v965 = vld [vmem:[#allocation2 + $0xd0] sm:$0xff]
          %v966 = vld [vmem:[#allocation2 + $0xd8] sm:$0xff]
          %v967 = vld [vmem:[#allocation2 + $0xe0] sm:$0xff]
          %v968 = vld [vmem:[#allocation2 + $0xe8] sm:$0xff]
          %v969 = vld [vmem:[#allocation2 + $0xf0] sm:$0xff]
          %v970 = vld [vmem:[#allocation2 + $0xf8] sm:$0xff]
          %v971 = vld [vmem:[%s3] sm:$0x1]
          %v973 = vlaneseq
          %v974 = vshrl.u32 %v973, 7
          %v975 = vsub.s32 0, %v974
          %v976 = vrot.slane %v971, %v975
          %v978 = vadd.f32 %v939, %v976
          %v979 = vadd.f32 %v940, %v976
          %v980 = vadd.f32 %v941, %v976
          %v981 = vadd.f32 %v942, %v976
          %v982 = vadd.f32 %v943, %v976
          %v983 = vadd.f32 %v944, %v976
          %v984 = vadd.f32 %v945, %v976
          %v985 = vadd.f32 %v946, %v976
          %v986 = vadd.f32 %v947, %v976
          %v987 = vadd.f32 %v948, %v976
          %v988 = vadd.f32 %v949, %v976
          %v989 = vadd.f32 %v950, %v976
          %v990 = vadd.f32 %v951, %v976
          %v991 = vadd.f32 %v952, %v976
          %v992 = vadd.f32 %v953, %v976
          %v993 = vadd.f32 %v954, %v976
          %v994 = vadd.f32 %v955, %v976
          %v995 = vadd.f32 %v956, %v976
          %v996 = vadd.f32 %v957, %v976
          %v997 = vadd.f32 %v958, %v976
          %v998 = vadd.f32 %v959, %v976
          %v999 = vadd.f32 %v960, %v976
          %v1000 = vadd.f32 %v961, %v976
          %v1001 = vadd.f32 %v962, %v976
          %v1002 = vadd.f32 %v963, %v976
          %v1003 = vadd.f32 %v964, %v976
          %v1004 = vadd.f32 %v965, %v976
          %v1005 = vadd.f32 %v966, %v976
          %v1006 = vadd.f32 %v967, %v976
          %v1007 = vadd.f32 %v968, %v976
          %v1008 = vadd.f32 %v969, %v976
          %v1009 = vadd.f32 %v970, %v976
          %v1010 = vmax.f32 %v978, 0.0
          %v1011 = vmax.f32 %v979, 0.0
          %v1012 = vmax.f32 %v980, 0.0
          %v1013 = vmax.f32 %v981, 0.0
          %v1014 = vmax.f32 %v982, 0.0
          %v1015 = vmax.f32 %v983, 0.0
          %v1016 = vmax.f32 %v984, 0.0
          %v1017 = vmax.f32 %v985, 0.0
          %v1018 = vmax.f32 %v986, 0.0
          %v1019 = vmax.f32 %v987, 0.0
          %v1020 = vmax.f32 %v988, 0.0
          %v1021 = vmax.f32 %v989, 0.0
          %v1022 = vmax.f32 %v990, 0.0
          %v1023 = vmax.f32 %v991, 0.0
          %v1024 = vmax.f32 %v992, 0.0
          %v1025 = vmax.f32 %v993, 0.0
          %v1026 = vmax.f32 %v994, 0.0
          %v1027 = vmax.f32 %v995, 0.0
          %v1028 = vmax.f32 %v996, 0.0
          %v1029 = vmax.f32 %v997, 0.0
          %v1030 = vmax.f32 %v998, 0.0
          %v1031 = vmax.f32 %v999, 0.0
          %v1032 = vmax.f32 %v1000, 0.0
          %v1033 = vmax.f32 %v1001, 0.0
          %v1034 = vmax.f32 %v1002, 0.0
          %v1035 = vmax.f32 %v1003, 0.0
          %v1036 = vmax.f32 %v1004, 0.0
          %v1037 = vmax.f32 %v1005, 0.0
          %v1038 = vmax.f32 %v1006, 0.0
          %v1039 = vmax.f32 %v1007, 0.0
          %v1040 = vmax.f32 %v1008, 0.0
          %v1041 = vmax.f32 %v1009, 0.0
          %v1042 = vpack.c.bf16 %v1011, %v1010
          %v1043 = vpack.c.bf16 %v1013, %v1012
          %v1044 = vpack.c.bf16 %v1015, %v1014
          %v1045 = vpack.c.bf16 %v1017, %v1016
          %v1046 = vpack.c.bf16 %v1019, %v1018
          %v1047 = vpack.c.bf16 %v1021, %v1020
          %v1048 = vpack.c.bf16 %v1023, %v1022
          %v1049 = vpack.c.bf16 %v1025, %v1024
          %v1050 = vpack.c.bf16 %v1027, %v1026
          %v1051 = vpack.c.bf16 %v1029, %v1028
          %v1052 = vpack.c.bf16 %v1031, %v1030
          %v1053 = vpack.c.bf16 %v1033, %v1032
          %v1054 = vpack.c.bf16 %v1035, %v1034
          %v1055 = vpack.c.bf16 %v1037, %v1036
          %v1056 = vpack.c.bf16 %v1039, %v1038
          %v1057 = vpack.c.bf16 %v1041, %v1040
          %v1058 = vld [vmem:[%s4] sm:$0xf]
          %v1059 = vld [vmem:[%s4 + $0x4] sm:$0xf]
          %v1060 = vld [vmem:[%s4 + $0x8] sm:$0xf]
          %v1061 = vld [vmem:[%s4 + $0xc] sm:$0xf]
          %v1062 = vld [vmem:[%s4 + $0x10] sm:$0xf]
          %v1063 = vld [vmem:[%s4 + $0x14] sm:$0xf]
          %v1064 = vld [vmem:[%s4 + $0x18] sm:$0xf]
          %v1065 = vld [vmem:[%s4 + $0x1c] sm:$0xf]
          %v1066 = vld [vmem:[%s4 + $0x20] sm:$0xf]
          %v1067 = vld [vmem:[%s4 + $0x24] sm:$0xf]
          %v1068 = vld [vmem:[%s4 + $0x28] sm:$0xf]
          %v1069 = vld [vmem:[%s4 + $0x2c] sm:$0xf]
          %v1070 = vld [vmem:[%s4 + $0x30] sm:$0xf]
          %v1071 = vld [vmem:[%s4 + $0x34] sm:$0xf]
          %v1072 = vld [vmem:[%s4 + $0x38] sm:$0xf]
          %v1073 = vld [vmem:[%s4 + $0x3c] sm:$0xf]
          %v1090 = vunpack.c.l.b16 %v1058
          %v1091 = vunpack.c.l.b16 %v1059
          %v1092 = vunpack.c.l.b16 %v1060
          %v1093 = vunpack.c.l.b16 %v1061
          %v1094 = vunpack.c.l.b16 %v1062
          %v1095 = vunpack.c.l.b16 %v1063
          %v1096 = vunpack.c.l.b16 %v1064
          %v1097 = vunpack.c.l.b16 %v1065
          %v1098 = vunpack.c.l.b16 %v1066
          %v1099 = vunpack.c.l.b16 %v1067
          %v1100 = vunpack.c.l.b16 %v1068
          %v1101 = vunpack.c.l.b16 %v1069
          %v1102 = vunpack.c.l.b16 %v1070
          %v1103 = vunpack.c.l.b16 %v1071
          %v1104 = vunpack.c.l.b16 %v1072
          %v1105 = vunpack.c.l.b16 %v1073
          %v1106 = vpack.c.b16 %v1091, %v1090
          %v1107 = vpack.c.b16 %v1093, %v1092
          %v1108 = vpack.c.b16 %v1095, %v1094
          %v1109 = vpack.c.b16 %v1097, %v1096
          %v1110 = vpack.c.b16 %v1099, %v1098
          %v1111 = vpack.c.b16 %v1101, %v1100
          %v1112 = vpack.c.b16 %v1103, %v1102
          %v1113 = vpack.c.b16 %v1105, %v1104
          %1122 = vmatprep.subr.bf16.mxu0 0
          %1123 = vmatpush1.bf16.msra.mxu0 %v1106
          %1124 = vmatprep.subr.bf16.mxu0 0
          %1125 = vmatpush1.bf16.msra.mxu0 %v1107
          %1126 = vmatprep.subr.bf16.mxu0 0
          %1127 = vmatpush1.bf16.msra.mxu0 %v1108
          %1128 = vmatprep.subr.bf16.mxu0 0
          %1129 = vmatpush1.bf16.msra.mxu0 %v1109
          %1130 = vmatprep.subr.bf16.mxu0 0
          %1131 = vmatpush1.bf16.msra.mxu0 %v1110
          %1132 = vmatprep.subr.bf16.mxu0 0
          %1133 = vmatpush1.bf16.msra.mxu0 %v1111
          %1134 = vmatprep.subr.bf16.mxu0 0
          %1135 = vmatpush1.bf16.msra.mxu0 %v1112
          %1136 = vmatprep.subr.bf16.mxu0 0
          %1137 = vmatpush1.bf16.msra.mxu0 %v1113
          %1138 = vmatprep.subr.bf16.mxu0 0
          %1139 = vmatpush1.bf16.msra.mxu0 0
          %1140 = vmatprep.subr.bf16.mxu0 0
          %1141 = vmatpush1.bf16.msra.mxu0 0
          %1142 = vmatprep.subr.bf16.mxu0 0
          %1143 = vmatpush1.bf16.msra.mxu0 0
          %1144 = vmatprep.subr.bf16.mxu0 0
          %1145 = vmatpush1.bf16.msra.mxu0 0
          %1146 = vmatprep.subr.bf16.mxu0 0
          %1147 = vmatpush1.bf16.msra.mxu0 0
          %1148 = vmatprep.subr.bf16.mxu0 0
          %1149 = vmatpush1.bf16.msra.mxu0 0
          %1150 = vmatprep.subr.bf16.mxu0 0
          %1151 = vmatpush1.bf16.msra.mxu0 0
          %1152 = vmatprep.subr.bf16.mxu0 0
          %1153 = vmatpush1.bf16.msra.mxu0 0
          %1154 = vmatprep.mubr.bf16.mxu0 0
          %1155 = vmatmul.mubr.bf16.gmra.mrb[0].mxu0 %v1042
          %v1156 = vpop.f32.mrb[0].mxu0
          %v1157 = vadd.f32 0.0, %v1156
          %v1158 = vpop.f32.mrb[0].mxu0
          %v1159 = vpop.f32.mrb[0].mxu0
          %v1160 = vadd.f32 0.0, %v1159
          %v1161 = vpop.f32.mrb[0].mxu0
          %1162 = vmatprep.mubr.bf16.mxu0 0
          %1163 = vmatmul.mubr.bf16.gmra.mrb[0].mxu0 %v1043
          %v1164 = vpop.f32.mrb[0].mxu0
          %v1165 = vadd.f32 0.0, %v1164
          %v1166 = vpop.f32.mrb[0].mxu0
          %v1167 = vpop.f32.mrb[0].mxu0
          %v1168 = vadd.f32 0.0, %v1167
          %v1169 = vpop.f32.mrb[0].mxu0
          %1170 = vmatprep.mubr.bf16.mxu0 0
          %1171 = vmatmul.mubr.bf16.gmra.mrb[0].mxu0 %v1044
          %v1172 = vpop.f32.mrb[0].mxu0
          %v1173 = vadd.f32 0.0, %v1172
          %v1174 = vpop.f32.mrb[0].mxu0
          %v1175 = vpop.f32.mrb[0].mxu0
          %v1176 = vadd.f32 0.0, %v1175
          %v1177 = vpop.f32.mrb[0].mxu0
          %1178 = vmatprep.mubr.bf16.mxu0 0
          %1179 = vmatmul.mubr.bf16.gmra.mrb[0].mxu0 %v1045
          %v1180 = vpop.f32.mrb[0].mxu0
          %v1181 = vadd.f32 0.0, %v1180
          %v1182 = vpop.f32.mrb[0].mxu0
          %v1183 = vpop.f32.mrb[0].mxu0
          %v1184 = vadd.f32 0.0, %v1183
          %v1185 = vpop.f32.mrb[0].mxu0
          %1186 = vmatprep.mubr.bf16.mxu0 0
          %1187 = vmatmul.mubr.bf16.gmra.mrb[0].mxu0 %v1046
          %v1188 = vpop.f32.mrb[0].mxu0
          %v1189 = vadd.f32 0.0, %v1188
          %v1190 = vpop.f32.mrb[0].mxu0
          %v1191 = vpop.f32.mrb[0].mxu0
          %v1192 = vadd.f32 0.0, %v1191
          %v1193 = vpop.f32.mrb[0].mxu0
          %1194 = vmatprep.mubr.bf16.mxu0 0
          %1195 = vmatmul.mubr.bf16.gmra.mrb[0].mxu0 %v1047
          %v1196 = vpop.f32.mrb[0].mxu0
          %v1197 = vadd.f32 0.0, %v1196
          %v1198 = vpop.f32.mrb[0].mxu0
          %v1199 = vpop.f32.mrb[0].mxu0
          %v1200 = vadd.f32 0.0, %v1199
          %v1201 = vpop.f32.mrb[0].mxu0
          %1202 = vmatprep.mubr.bf16.mxu0 0
          %1203 = vmatmul.mubr.bf16.gmra.mrb[0].mxu0 %v1048
          %v1204 = vpop.f32.mrb[0].mxu0
          %v1205 = vadd.f32 0.0, %v1204
          %v1206 = vpop.f32.mrb[0].mxu0
          %v1207 = vpop.f32.mrb[0].mxu0
          %v1208 = vadd.f32 0.0, %v1207
          %v1209 = vpop.f32.mrb[0].mxu0
          %1210 = vmatprep.mubr.bf16.mxu0 0
          %1211 = vmatmul.mubr.bf16.gmra.mrb[0].mxu0 %v1049
          %v1212 = vpop.f32.mrb[0].mxu0
          %v1213 = vadd.f32 0.0, %v1212
          %v1214 = vpop.f32.mrb[0].mxu0
          %v1215 = vpop.f32.mrb[0].mxu0
          %v1216 = vadd.f32 0.0, %v1215
          %v1217 = vpop.f32.mrb[0].mxu0
          %1218 = vmatprep.mubr.bf16.mxu0 0
          %1219 = vmatmul.mubr.bf16.gmra.mrb[0].mxu0 %v1050
          %v1220 = vpop.f32.mrb[0].mxu0
          %v1221 = vadd.f32 0.0, %v1220
          %v1222 = vpop.f32.mrb[0].mxu0
          %v1223 = vpop.f32.mrb[0].mxu0
          %v1224 = vadd.f32 0.0, %v1223
          %v1225 = vpop.f32.mrb[0].mxu0
          %1226 = vmatprep.mubr.bf16.mxu0 0
          %1227 = vmatmul.mubr.bf16.gmra.mrb[0].mxu0 %v1051
          %v1228 = vpop.f32.mrb[0].mxu0
          %v1229 = vadd.f32 0.0, %v1228
          %v1230 = vpop.f32.mrb[0].mxu0
          %v1231 = vpop.f32.mrb[0].mxu0
          %v1232 = vadd.f32 0.0, %v1231
          %v1233 = vpop.f32.mrb[0].mxu0
          %1234 = vmatprep.mubr.bf16.mxu0 0
          %1235 = vmatmul.mubr.bf16.gmra.mrb[0].mxu0 %v1052
          %v1236 = vpop.f32.mrb[0].mxu0
          %v1237 = vadd.f32 0.0, %v1236
          %v1238 = vpop.f32.mrb[0].mxu0
          %v1239 = vpop.f32.mrb[0].mxu0
          %v1240 = vadd.f32 0.0, %v1239
          %v1241 = vpop.f32.mrb[0].mxu0
          %1242 = vmatprep.mubr.bf16.mxu0 0
          %1243 = vmatmul.mubr.bf16.gmra.mrb[0].mxu0 %v1053
          %v1244 = vpop.f32.mrb[0].mxu0
          %v1245 = vadd.f32 0.0, %v1244
          %v1246 = vpop.f32.mrb[0].mxu0
          %v1247 = vpop.f32.mrb[0].mxu0
          %v1248 = vadd.f32 0.0, %v1247
          %v1249 = vpop.f32.mrb[0].mxu0
          %1250 = vmatprep.mubr.bf16.mxu0 0
          %1251 = vmatmul.mubr.bf16.gmra.mrb[0].mxu0 %v1054
          %v1252 = vpop.f32.mrb[0].mxu0
          %v1253 = vadd.f32 0.0, %v1252
          %v1254 = vpop.f32.mrb[0].mxu0
          %v1255 = vpop.f32.mrb[0].mxu0
          %v1256 = vadd.f32 0.0, %v1255
          %v1257 = vpop.f32.mrb[0].mxu0
          %1258 = vmatprep.mubr.bf16.mxu0 0
          %1259 = vmatmul.mubr.bf16.gmra.mrb[0].mxu0 %v1055
          %v1260 = vpop.f32.mrb[0].mxu0
          %v1261 = vadd.f32 0.0, %v1260
          %v1262 = vpop.f32.mrb[0].mxu0
          %v1263 = vpop.f32.mrb[0].mxu0
          %v1264 = vadd.f32 0.0, %v1263
          %v1265 = vpop.f32.mrb[0].mxu0
          %1266 = vmatprep.mubr.bf16.mxu0 0
          %1267 = vmatmul.mubr.bf16.gmra.mrb[0].mxu0 %v1056
          %v1268 = vpop.f32.mrb[0].mxu0
          %v1269 = vadd.f32 0.0, %v1268
          %v1270 = vpop.f32.mrb[0].mxu0
          %v1271 = vpop.f32.mrb[0].mxu0
          %v1272 = vadd.f32 0.0, %v1271
          %v1273 = vpop.f32.mrb[0].mxu0
          %1274 = vmatprep.mubr.bf16.mxu0 0
          %1275 = vmatmul.mubr.bf16.gmra.mrb[0].mxu0 %v1057
          %v1276 = vpop.f32.mrb[0].mxu0
          %v1277 = vadd.f32 0.0, %v1276
          %v1278 = vpop.f32.mrb[0].mxu0
          %v1279 = vpop.f32.mrb[0].mxu0
          %v1280 = vadd.f32 0.0, %v1279
          %v1281 = vpop.f32.mrb[0].mxu0
          %1282 = vdwg.mxu0
          %v1283 = vpack.c.bf16 %v1160, %v1157
          %v1284 = vpack.c.bf16 %v1168, %v1165
          %v1285 = vpack.c.bf16 %v1176, %v1173
          %v1286 = vpack.c.bf16 %v1184, %v1181
          %v1287 = vpack.c.bf16 %v1192, %v1189
          %v1288 = vpack.c.bf16 %v1200, %v1197
          %v1289 = vpack.c.bf16 %v1208, %v1205
          %v1290 = vpack.c.bf16 %v1216, %v1213
          %v1291 = vpack.c.bf16 %v1224, %v1221
          %v1292 = vpack.c.bf16 %v1232, %v1229
          %v1293 = vpack.c.bf16 %v1240, %v1237
          %v1294 = vpack.c.bf16 %v1248, %v1245
          %v1295 = vpack.c.bf16 %v1256, %v1253
          %v1296 = vpack.c.bf16 %v1264, %v1261
          %v1297 = vpack.c.bf16 %v1272, %v1269
          %v1298 = vpack.c.bf16 %v1280, %v1277
          %1299 = vst [vmem:[#allocation3] sm:$0xff] %v1283
          %1300 = vst [vmem:[#allocation3 + $0x8] sm:$0xff] %v1284
          %1301 = vst [vmem:[#allocation3 + $0x10] sm:$0xff] %v1285
          %1302 = vst [vmem:[#allocation3 + $0x18] sm:$0xff] %v1286
          %1303 = vst [vmem:[#allocation3 + $0x20] sm:$0xff] %v1287
          %1304 = vst [vmem:[#allocation3 + $0x28] sm:$0xff] %v1288
          %1305 = vst [vmem:[#allocation3 + $0x30] sm:$0xff] %v1289
          %1306 = vst [vmem:[#allocation3 + $0x38] sm:$0xff] %v1290
          %1307 = vst [vmem:[#allocation3 + $0x40] sm:$0xff] %v1291
          %1308 = vst [vmem:[#allocation3 + $0x48] sm:$0xff] %v1292
          %1309 = vst [vmem:[#allocation3 + $0x50] sm:$0xff] %v1293
          %1310 = vst [vmem:[#allocation3 + $0x58] sm:$0xff] %v1294
          %1311 = vst [vmem:[#allocation3 + $0x60] sm:$0xff] %v1295
          %1312 = vst [vmem:[#allocation3 + $0x68] sm:$0xff] %v1296
          %1313 = vst [vmem:[#allocation3 + $0x70] sm:$0xff] %v1297
          %1314 = vst [vmem:[#allocation3 + $0x78] sm:$0xff] %v1298
        $region60: #{tpu_custom_call.1} parent=43 // pred_fallthru
          _
        %p1315 = scmp.eq.s32.totalorder %s25, 1
        %p1316 = pnand %p1315, %p307
        %p1317 = pneg %p1316
        // Predicated region
        $region61: #{tpu_custom_call.1} parent=43 // pred_check
          _
        $region62: #{tpu_custom_call.1} parent=43 // pred_check_branch
          %1319 = sbr.rel (%p1316) target = $region64
        $region63: #{tpu_custom_call.1} parent=43 // pred_region
          %v1320 = vld [vmem:[%s5] sm:$0x1]
          %v1322 = vlaneseq
          %v1323 = vshrl.u32 %v1322, 7
          %v1324 = vsub.s32 0, %v1323
          %v1325 = vrot.slane %v1320, %v1324
          %1327 = vst [vmem:[#allocation7] sm:$0xff] %v1325
          %1328 = vst [vmem:[#allocation7 + $0x8] sm:$0xff] %v1325
          %1329 = vst [vmem:[#allocation7 + $0x10] sm:$0xff] %v1325
          %1330 = vst [vmem:[#allocation7 + $0x18] sm:$0xff] %v1325
          %1331 = vst [vmem:[#allocation7 + $0x20] sm:$0xff] %v1325
          %1332 = vst [vmem:[#allocation7 + $0x28] sm:$0xff] %v1325
          %1333 = vst [vmem:[#allocation7 + $0x30] sm:$0xff] %v1325
          %1334 = vst [vmem:[#allocation7 + $0x38] sm:$0xff] %v1325
          %1335 = vst [vmem:[#allocation7 + $0x40] sm:$0xff] %v1325
          %1336 = vst [vmem:[#allocation7 + $0x48] sm:$0xff] %v1325
          %1337 = vst [vmem:[#allocation7 + $0x50] sm:$0xff] %v1325
          %1338 = vst [vmem:[#allocation7 + $0x58] sm:$0xff] %v1325
          %1339 = vst [vmem:[#allocation7 + $0x60] sm:$0xff] %v1325
          %1340 = vst [vmem:[#allocation7 + $0x68] sm:$0xff] %v1325
          %1341 = vst [vmem:[#allocation7 + $0x70] sm:$0xff] %v1325
          %1342 = vst [vmem:[#allocation7 + $0x78] sm:$0xff] %v1325
          %1343 = vst [vmem:[#allocation7 + $0x80] sm:$0xff] %v1325
          %1344 = vst [vmem:[#allocation7 + $0x88] sm:$0xff] %v1325
          %1345 = vst [vmem:[#allocation7 + $0x90] sm:$0xff] %v1325
          %1346 = vst [vmem:[#allocation7 + $0x98] sm:$0xff] %v1325
          %1347 = vst [vmem:[#allocation7 + $0xa0] sm:$0xff] %v1325
          %1348 = vst [vmem:[#allocation7 + $0xa8] sm:$0xff] %v1325
          %1349 = vst [vmem:[#allocation7 + $0xb0] sm:$0xff] %v1325
          %1350 = vst [vmem:[#allocation7 + $0xb8] sm:$0xff] %v1325
          %1351 = vst [vmem:[#allocation7 + $0xc0] sm:$0xff] %v1325
          %1352 = vst [vmem:[#allocation7 + $0xc8] sm:$0xff] %v1325
          %1353 = vst [vmem:[#allocation7 + $0xd0] sm:$0xff] %v1325
          %1354 = vst [vmem:[#allocation7 + $0xd8] sm:$0xff] %v1325
          %1355 = vst [vmem:[#allocation7 + $0xe0] sm:$0xff] %v1325
          %1356 = vst [vmem:[#allocation7 + $0xe8] sm:$0xff] %v1325
          %1357 = vst [vmem:[#allocation7 + $0xf0] sm:$0xff] %v1325
          %1358 = vst [vmem:[#allocation7 + $0xf8] sm:$0xff] %v1325
        $region64: #{tpu_custom_call.1} parent=43 // pred_fallthru
          _
        // Predicated region
        $region65: #{tpu_custom_call.1} parent=43 // pred_check
          %p1359 = pneg %p1315
        $region66: #{tpu_custom_call.1} parent=43 // pred_check_branch
          %1361 = sbr.rel (%p1359) target = $region68
        $region67: #{tpu_custom_call.1} parent=43 // pred_region
          %s1362 = smul.u32 %s26, 128
          %s1363 = sshra.s32 %s1362, 4
          %s1364 = sand.u32 %s1362, 15
          %s1365 = smul.addr %s1363, 8
          %s1366 = scalar_lea.vmem [#allocation3], %s1365
          %v1367 = vld [vmem:[%s1366] sm:$0xff]
          %v1368 = vld [vmem:[%s1366 + $0x8] sm:$0xff]
          %v1369 = vld [vmem:[%s1366 + $0x10] sm:$0xff]
          %v1370 = vld [vmem:[%s1366 + $0x18] sm:$0xff]
          %v1371 = vld [vmem:[%s1366 + $0x20] sm:$0xff]
          %v1372 = vld [vmem:[%s1366 + $0x28] sm:$0xff]
          %v1373 = vld [vmem:[%s1366 + $0x30] sm:$0xff]
          %v1374 = vld [vmem:[%s1366 + $0x38] sm:$0xff]
          %v1375 = vld [vmem:[#allocation7] sm:$0xff]
          %v1376 = vld [vmem:[#allocation7 + $0x8] sm:$0xff]
          %v1377 = vld [vmem:[#allocation7 + $0x10] sm:$0xff]
          %v1378 = vld [vmem:[#allocation7 + $0x18] sm:$0xff]
          %v1379 = vld [vmem:[#allocation7 + $0x20] sm:$0xff]
          %v1380 = vld [vmem:[#allocation7 + $0x28] sm:$0xff]
          %v1381 = vld [vmem:[#allocation7 + $0x30] sm:$0xff]
          %v1382 = vld [vmem:[#allocation7 + $0x38] sm:$0xff]
          %v1383 = vld [vmem:[#allocation7 + $0x40] sm:$0xff]
          %v1384 = vld [vmem:[#allocation7 + $0x48] sm:$0xff]
          %v1385 = vld [vmem:[#allocation7 + $0x50] sm:$0xff]
          %v1386 = vld [vmem:[#allocation7 + $0x58] sm:$0xff]
          %v1387 = vld [vmem:[#allocation7 + $0x60] sm:$0xff]
          %v1388 = vld [vmem:[#allocation7 + $0x68] sm:$0xff]
          %v1389 = vld [vmem:[#allocation7 + $0x70] sm:$0xff]
          %v1390 = vld [vmem:[#allocation7 + $0x78] sm:$0xff]
          %v1391 = vld [vmem:[#allocation7 + $0x80] sm:$0xff]
          %v1392 = vld [vmem:[#allocation7 + $0x88] sm:$0xff]
          %v1393 = vld [vmem:[#allocation7 + $0x90] sm:$0xff]
          %v1394 = vld [vmem:[#allocation7 + $0x98] sm:$0xff]
          %v1395 = vld [vmem:[#allocation7 + $0xa0] sm:$0xff]
          %v1396 = vld [vmem:[#allocation7 + $0xa8] sm:$0xff]
          %v1397 = vld [vmem:[#allocation7 + $0xb0] sm:$0xff]
          %v1398 = vld [vmem:[#allocation7 + $0xb8] sm:$0xff]
          %v1399 = vld [vmem:[#allocation7 + $0xc0] sm:$0xff]
          %v1400 = vld [vmem:[#allocation7 + $0xc8] sm:$0xff]
          %v1401 = vld [vmem:[#allocation7 + $0xd0] sm:$0xff]
          %v1402 = vld [vmem:[#allocation7 + $0xd8] sm:$0xff]
          %v1403 = vld [vmem:[#allocation7 + $0xe0] sm:$0xff]
          %v1404 = vld [vmem:[#allocation7 + $0xe8] sm:$0xff]
          %v1405 = vld [vmem:[#allocation7 + $0xf0] sm:$0xff]
          %v1406 = vld [vmem:[#allocation7 + $0xf8] sm:$0xff]
          %v1407 = vld [vmem:[%s264] sm:$0xf]
          %v1408 = vld [vmem:[%s264 + $0x4] sm:$0xf]
          %v1409 = vld [vmem:[%s264 + $0x8] sm:$0xf]
          %v1410 = vld [vmem:[%s264 + $0xc] sm:$0xf]
          %v1411 = vld [vmem:[%s264 + $0x10] sm:$0xf]
          %v1412 = vld [vmem:[%s264 + $0x14] sm:$0xf]
          %v1413 = vld [vmem:[%s264 + $0x18] sm:$0xf]
          %v1414 = vld [vmem:[%s264 + $0x1c] sm:$0xf]
          %v1415 = vld [vmem:[%s264 + $0x20] sm:$0xf]
          %v1416 = vld [vmem:[%s264 + $0x24] sm:$0xf]
          %v1417 = vld [vmem:[%s264 + $0x28] sm:$0xf]
          %v1418 = vld [vmem:[%s264 + $0x2c] sm:$0xf]
          %v1419 = vld [vmem:[%s264 + $0x30] sm:$0xf]
          %v1420 = vld [vmem:[%s264 + $0x34] sm:$0xf]
          %v1421 = vld [vmem:[%s264 + $0x38] sm:$0xf]
          %v1422 = vld [vmem:[%s264 + $0x3c] sm:$0xf]
          %v1423 = vld [vmem:[%s264 + $0x40] sm:$0xf]
          %v1424 = vld [vmem:[%s264 + $0x44] sm:$0xf]
          %v1425 = vld [vmem:[%s264 + $0x48] sm:$0xf]
          %v1426 = vld [vmem:[%s264 + $0x4c] sm:$0xf]
          %v1427 = vld [vmem:[%s264 + $0x50] sm:$0xf]
          %v1428 = vld [vmem:[%s264 + $0x54] sm:$0xf]
          %v1429 = vld [vmem:[%s264 + $0x58] sm:$0xf]
          %v1430 = vld [vmem:[%s264 + $0x5c] sm:$0xf]
          %v1431 = vld [vmem:[%s264 + $0x60] sm:$0xf]
          %v1432 = vld [vmem:[%s264 + $0x64] sm:$0xf]
          %v1433 = vld [vmem:[%s264 + $0x68] sm:$0xf]
          %v1434 = vld [vmem:[%s264 + $0x6c] sm:$0xf]
          %v1435 = vld [vmem:[%s264 + $0x70] sm:$0xf]
          %v1436 = vld [vmem:[%s264 + $0x74] sm:$0xf]
          %v1437 = vld [vmem:[%s264 + $0x78] sm:$0xf]
          %v1438 = vld [vmem:[%s264 + $0x7c] sm:$0xf]
          %v1471 = vunpack.c.l.b16 %v1407
          %v1472 = vunpack.c.l.b16 %v1408
          %v1473 = vunpack.c.l.b16 %v1409
          %v1474 = vunpack.c.l.b16 %v1410
          %v1475 = vunpack.c.l.b16 %v1411
          %v1476 = vunpack.c.l.b16 %v1412
          %v1477 = vunpack.c.l.b16 %v1413
          %v1478 = vunpack.c.l.b16 %v1414
          %v1479 = vunpack.c.l.b16 %v1415
          %v1480 = vunpack.c.l.b16 %v1416
          %v1481 = vunpack.c.l.b16 %v1417
          %v1482 = vunpack.c.l.b16 %v1418
          %v1483 = vunpack.c.l.b16 %v1419
          %v1484 = vunpack.c.l.b16 %v1420
          %v1485 = vunpack.c.l.b16 %v1421
          %v1486 = vunpack.c.l.b16 %v1422
          %v1487 = vunpack.c.l.b16 %v1423
          %v1488 = vunpack.c.l.b16 %v1424
          %v1489 = vunpack.c.l.b16 %v1425
          %v1490 = vunpack.c.l.b16 %v1426
          %v1491 = vunpack.c.l.b16 %v1427
          %v1492 = vunpack.c.l.b16 %v1428
          %v1493 = vunpack.c.l.b16 %v1429
          %v1494 = vunpack.c.l.b16 %v1430
          %v1495 = vunpack.c.l.b16 %v1431
          %v1496 = vunpack.c.l.b16 %v1432
          %v1497 = vunpack.c.l.b16 %v1433
          %v1498 = vunpack.c.l.b16 %v1434
          %v1499 = vunpack.c.l.b16 %v1435
          %v1500 = vunpack.c.l.b16 %v1436
          %v1501 = vunpack.c.l.b16 %v1437
          %v1502 = vunpack.c.l.b16 %v1438
          %v1503 = vpack.c.b16 %v1472, %v1471
          %v1504 = vpack.c.b16 %v1474, %v1473
          %v1505 = vpack.c.b16 %v1476, %v1475
          %v1506 = vpack.c.b16 %v1478, %v1477
          %v1507 = vpack.c.b16 %v1480, %v1479
          %v1508 = vpack.c.b16 %v1482, %v1481
          %v1509 = vpack.c.b16 %v1484, %v1483
          %v1510 = vpack.c.b16 %v1486, %v1485
          %v1511 = vpack.c.b16 %v1488, %v1487
          %v1512 = vpack.c.b16 %v1490, %v1489
          %v1513 = vpack.c.b16 %v1492, %v1491
          %v1514 = vpack.c.b16 %v1494, %v1493
          %v1515 = vpack.c.b16 %v1496, %v1495
          %v1516 = vpack.c.b16 %v1498, %v1497
          %v1517 = vpack.c.b16 %v1500, %v1499
          %v1518 = vpack.c.b16 %v1502, %v1501
          %1535 = vmatprep.subr.bf16.mxu0 0
          %1536 = vmatpush1.bf16.msra.mxu0 %v1367
          %1537 = vmatprep.subr.bf16.mxu0 0
          %1538 = vmatpush1.bf16.msra.mxu0 %v1368
          %1539 = vmatprep.subr.bf16.mxu0 0
          %1540 = vmatpush1.bf16.msra.mxu0 %v1369
          %1541 = vmatprep.subr.bf16.mxu0 0
          %1542 = vmatpush1.bf16.msra.mxu0 %v1370
          %1543 = vmatprep.subr.bf16.mxu0 0
          %1544 = vmatpush1.bf16.msra.mxu0 %v1371
          %1545 = vmatprep.subr.bf16.mxu0 0
          %1546 = vmatpush1.bf16.msra.mxu0 %v1372
          %1547 = vmatprep.subr.bf16.mxu0 0
          %1548 = vmatpush1.bf16.msra.mxu0 %v1373
          %1549 = vmatprep.subr.bf16.mxu0 0
          %1550 = vmatpush1.bf16.msra.mxu0 %v1374
          %1551 = vmatprep.subr.bf16.mxu0 0
          %1552 = vmatpush1.bf16.msra.mxu0 0
          %1553 = vmatprep.subr.bf16.mxu0 0
          %1554 = vmatpush1.bf16.msra.mxu0 0
          %1555 = vmatprep.subr.bf16.mxu0 0
          %1556 = vmatpush1.bf16.msra.mxu0 0
          %1557 = vmatprep.subr.bf16.mxu0 0
          %1558 = vmatpush1.bf16.msra.mxu0 0
          %1559 = vmatprep.subr.bf16.mxu0 0
          %1560 = vmatpush1.bf16.msra.mxu0 0
          %1561 = vmatprep.subr.bf16.mxu0 0
          %1562 = vmatpush1.bf16.msra.mxu0 0
          %1563 = vmatprep.subr.bf16.mxu0 0
          %1564 = vmatpush1.bf16.msra.mxu0 0
          %1565 = vmatprep.subr.bf16.mxu0 0
          %1566 = vmatpush1.bf16.msra.mxu0 0
          %1567 = vmatprep.mubr.bf16.mxu0 0
          %1568 = vmatmul.mubr.bf16.gmra.mrb[0].mxu0 %v1503
          %v1569 = vpop.f32.mrb[0].mxu0
          %v1570 = vadd.f32 0.0, %v1569
          %v1571 = vpop.f32.mrb[0].mxu0
          %v1572 = vpop.f32.mrb[0].mxu0
          %v1573 = vadd.f32 0.0, %v1572
          %v1574 = vpop.f32.mrb[0].mxu0
          %1575 = vmatprep.mubr.bf16.mxu0 0
          %1576 = vmatmul.mubr.bf16.gmra.mrb[0].mxu0 %v1504
          %v1577 = vpop.f32.mrb[0].mxu0
          %v1578 = vadd.f32 0.0, %v1577
          %v1579 = vpop.f32.mrb[0].mxu0
          %v1580 = vpop.f32.mrb[0].mxu0
          %v1581 = vadd.f32 0.0, %v1580
          %v1582 = vpop.f32.mrb[0].mxu0
          %1583 = vmatprep.mubr.bf16.mxu0 0
          %1584 = vmatmul.mubr.bf16.gmra.mrb[0].mxu0 %v1505
          %v1585 = vpop.f32.mrb[0].mxu0
          %v1586 = vadd.f32 0.0, %v1585
          %v1587 = vpop.f32.mrb[0].mxu0
          %v1588 = vpop.f32.mrb[0].mxu0
          %v1589 = vadd.f32 0.0, %v1588
          %v1590 = vpop.f32.mrb[0].mxu0
          %1591 = vmatprep.mubr.bf16.mxu0 0
          %1592 = vmatmul.mubr.bf16.gmra.mrb[0].mxu0 %v1506
          %v1593 = vpop.f32.mrb[0].mxu0
          %v1594 = vadd.f32 0.0, %v1593
          %v1595 = vpop.f32.mrb[0].mxu0
          %v1596 = vpop.f32.mrb[0].mxu0
          %v1597 = vadd.f32 0.0, %v1596
          %v1598 = vpop.f32.mrb[0].mxu0
          %1599 = vmatprep.mubr.bf16.mxu0 0
          %1600 = vmatmul.mubr.bf16.gmra.mrb[0].mxu0 %v1507
          %v1601 = vpop.f32.mrb[0].mxu0
          %v1602 = vadd.f32 0.0, %v1601
          %v1603 = vpop.f32.mrb[0].mxu0
          %v1604 = vpop.f32.mrb[0].mxu0
          %v1605 = vadd.f32 0.0, %v1604
          %v1606 = vpop.f32.mrb[0].mxu0
          %1607 = vmatprep.mubr.bf16.mxu0 0
          %1608 = vmatmul.mubr.bf16.gmra.mrb[0].mxu0 %v1508
          %v1609 = vpop.f32.mrb[0].mxu0
          %v1610 = vadd.f32 0.0, %v1609
          %v1611 = vpop.f32.mrb[0].mxu0
          %v1612 = vpop.f32.mrb[0].mxu0
          %v1613 = vadd.f32 0.0, %v1612
          %v1614 = vpop.f32.mrb[0].mxu0
          %1615 = vmatprep.mubr.bf16.mxu0 0
          %1616 = vmatmul.mubr.bf16.gmra.mrb[0].mxu0 %v1509
          %v1617 = vpop.f32.mrb[0].mxu0
          %v1618 = vadd.f32 0.0, %v1617
          %v1619 = vpop.f32.mrb[0].mxu0
          %v1620 = vpop.f32.mrb[0].mxu0
          %v1621 = vadd.f32 0.0, %v1620
          %v1622 = vpop.f32.mrb[0].mxu0
          %1623 = vmatprep.mubr.bf16.mxu0 0
          %1624 = vmatmul.mubr.bf16.gmra.mrb[0].mxu0 %v1510
          %v1625 = vpop.f32.mrb[0].mxu0
          %v1626 = vadd.f32 0.0, %v1625
          %v1627 = vpop.f32.mrb[0].mxu0
          %v1628 = vpop.f32.mrb[0].mxu0
          %v1629 = vadd.f32 0.0, %v1628
          %v1630 = vpop.f32.mrb[0].mxu0
          %1631 = vmatprep.mubr.bf16.mxu0 0
          %1632 = vmatmul.mubr.bf16.gmra.mrb[0].mxu0 %v1511
          %v1633 = vpop.f32.mrb[0].mxu0
          %v1634 = vadd.f32 0.0, %v1633
          %v1635 = vpop.f32.mrb[0].mxu0
          %v1636 = vpop.f32.mrb[0].mxu0
          %v1637 = vadd.f32 0.0, %v1636
          %v1638 = vpop.f32.mrb[0].mxu0
          %1639 = vmatprep.mubr.bf16.mxu0 0
          %1640 = vmatmul.mubr.bf16.gmra.mrb[0].mxu0 %v1512
          %v1641 = vpop.f32.mrb[0].mxu0
          %v1642 = vadd.f32 0.0, %v1641
          %v1643 = vpop.f32.mrb[0].mxu0
          %v1644 = vpop.f32.mrb[0].mxu0
          %v1645 = vadd.f32 0.0, %v1644
          %v1646 = vpop.f32.mrb[0].mxu0
          %1647 = vmatprep.mubr.bf16.mxu0 0
          %1648 = vmatmul.mubr.bf16.gmra.mrb[0].mxu0 %v1513
          %v1649 = vpop.f32.mrb[0].mxu0
          %v1650 = vadd.f32 0.0, %v1649
          %v1651 = vpop.f32.mrb[0].mxu0
          %v1652 = vpop.f32.mrb[0].mxu0
          %v1653 = vadd.f32 0.0, %v1652
          %v1654 = vpop.f32.mrb[0].mxu0
          %1655 = vmatprep.mubr.bf16.mxu0 0
          %1656 = vmatmul.mubr.bf16.gmra.mrb[0].mxu0 %v1514
          %v1657 = vpop.f32.mrb[0].mxu0
          %v1658 = vadd.f32 0.0, %v1657
          %v1659 = vpop.f32.mrb[0].mxu0
          %v1660 = vpop.f32.mrb[0].mxu0
          %v1661 = vadd.f32 0.0, %v1660
          %v1662 = vpop.f32.mrb[0].mxu0
          %1663 = vmatprep.mubr.bf16.mxu0 0
          %1664 = vmatmul.mubr.bf16.gmra.mrb[0].mxu0 %v1515
          %v1665 = vpop.f32.mrb[0].mxu0
          %v1666 = vadd.f32 0.0, %v1665
          %v1667 = vpop.f32.mrb[0].mxu0
          %v1668 = vpop.f32.mrb[0].mxu0
          %v1669 = vadd.f32 0.0, %v1668
          %v1670 = vpop.f32.mrb[0].mxu0
          %1671 = vmatprep.mubr.bf16.mxu0 0
          %1672 = vmatmul.mubr.bf16.gmra.mrb[0].mxu0 %v1516
          %v1673 = vpop.f32.mrb[0].mxu0
          %v1674 = vadd.f32 0.0, %v1673
          %v1675 = vpop.f32.mrb[0].mxu0
          %v1676 = vpop.f32.mrb[0].mxu0
          %v1677 = vadd.f32 0.0, %v1676
          %v1678 = vpop.f32.mrb[0].mxu0
          %1679 = vmatprep.mubr.bf16.mxu0 0
          %1680 = vmatmul.mubr.bf16.gmra.mrb[0].mxu0 %v1517
          %v1681 = vpop.f32.mrb[0].mxu0
          %v1682 = vadd.f32 0.0, %v1681
          %v1683 = vpop.f32.mrb[0].mxu0
          %v1684 = vpop.f32.mrb[0].mxu0
          %v1685 = vadd.f32 0.0, %v1684
          %v1686 = vpop.f32.mrb[0].mxu0
          %1687 = vmatprep.mubr.bf16.mxu0 0
          %1688 = vmatmul.mubr.bf16.gmra.mrb[0].mxu0 %v1518
          %v1689 = vpop.f32.mrb[0].mxu0
          %v1690 = vadd.f32 0.0, %v1689
          %v1691 = vpop.f32.mrb[0].mxu0
          %v1692 = vpop.f32.mrb[0].mxu0
          %v1693 = vadd.f32 0.0, %v1692
          %v1694 = vpop.f32.mrb[0].mxu0
          %1695 = vdwg.mxu0
          %v1696 = vadd.f32 %v1375, %v1570
          %v1697 = vadd.f32 %v1376, %v1573
          %v1698 = vadd.f32 %v1377, %v1578
          %v1699 = vadd.f32 %v1378, %v1581
          %v1700 = vadd.f32 %v1379, %v1586
          %v1701 = vadd.f32 %v1380, %v1589
          %v1702 = vadd.f32 %v1381, %v1594
          %v1703 = vadd.f32 %v1382, %v1597
          %v1704 = vadd.f32 %v1383, %v1602
          %v1705 = vadd.f32 %v1384, %v1605
          %v1706 = vadd.f32 %v1385, %v1610
          %v1707 = vadd.f32 %v1386, %v1613
          %v1708 = vadd.f32 %v1387, %v1618
          %v1709 = vadd.f32 %v1388, %v1621
          %v1710 = vadd.f32 %v1389, %v1626
          %v1711 = vadd.f32 %v1390, %v1629
          %v1712 = vadd.f32 %v1391, %v1634
          %v1713 = vadd.f32 %v1392, %v1637
          %v1714 = vadd.f32 %v1393, %v1642
          %v1715 = vadd.f32 %v1394, %v1645
          %v1716 = vadd.f32 %v1395, %v1650
          %v1717 = vadd.f32 %v1396, %v1653
          %v1718 = vadd.f32 %v1397, %v1658
          %v1719 = vadd.f32 %v1398, %v1661
          %v1720 = vadd.f32 %v1399, %v1666
          %v1721 = vadd.f32 %v1400, %v1669
          %v1722 = vadd.f32 %v1401, %v1674
          %v1723 = vadd.f32 %v1402, %v1677
          %v1724 = vadd.f32 %v1403, %v1682
          %v1725 = vadd.f32 %v1404, %v1685
          %v1726 = vadd.f32 %v1405, %v1690
          %v1727 = vadd.f32 %v1406, %v1693
          %1728 = vst [vmem:[#allocation7] sm:$0xff] %v1696
          %1729 = vst [vmem:[#allocation7 + $0x8] sm:$0xff] %v1697
          %1730 = vst [vmem:[#allocation7 + $0x10] sm:$0xff] %v1698
          %1731 = vst [vmem:[#allocation7 + $0x18] sm:$0xff] %v1699
          %1732 = vst [vmem:[#allocation7 + $0x20] sm:$0xff] %v1700
          %1733 = vst [vmem:[#allocation7 + $0x28] sm:$0xff] %v1701
          %1734 = vst [vmem:[#allocation7 + $0x30] sm:$0xff] %v1702
          %1735 = vst [vmem:[#allocation7 + $0x38] sm:$0xff] %v1703
          %1736 = vst [vmem:[#allocation7 + $0x40] sm:$0xff] %v1704
          %1737 = vst [vmem:[#allocation7 + $0x48] sm:$0xff] %v1705
          %1738 = vst [vmem:[#allocation7 + $0x50] sm:$0xff] %v1706
          %1739 = vst [vmem:[#allocation7 + $0x58] sm:$0xff] %v1707
          %1740 = vst [vmem:[#allocation7 + $0x60] sm:$0xff] %v1708
          %1741 = vst [vmem:[#allocation7 + $0x68] sm:$0xff] %v1709
          %1742 = vst [vmem:[#allocation7 + $0x70] sm:$0xff] %v1710
          %1743 = vst [vmem:[#allocation7 + $0x78] sm:$0xff] %v1711
          %1744 = vst [vmem:[#allocation7 + $0x80] sm:$0xff] %v1712
          %1745 = vst [vmem:[#allocation7 + $0x88] sm:$0xff] %v1713
          %1746 = vst [vmem:[#allocation7 + $0x90] sm:$0xff] %v1714
          %1747 = vst [vmem:[#allocation7 + $0x98] sm:$0xff] %v1715
          %1748 = vst [vmem:[#allocation7 + $0xa0] sm:$0xff] %v1716
          %1749 = vst [vmem:[#allocation7 + $0xa8] sm:$0xff] %v1717
          %1750 = vst [vmem:[#allocation7 + $0xb0] sm:$0xff] %v1718
          %1751 = vst [vmem:[#allocation7 + $0xb8] sm:$0xff] %v1719
          %1752 = vst [vmem:[#allocation7 + $0xc0] sm:$0xff] %v1720
          %1753 = vst [vmem:[#allocation7 + $0xc8] sm:$0xff] %v1721
          %1754 = vst [vmem:[#allocation7 + $0xd0] sm:$0xff] %v1722
          %1755 = vst [vmem:[#allocation7 + $0xd8] sm:$0xff] %v1723
          %1756 = vst [vmem:[#allocation7 + $0xe0] sm:$0xff] %v1724
          %1757 = vst [vmem:[#allocation7 + $0xe8] sm:$0xff] %v1725
          %1758 = vst [vmem:[#allocation7 + $0xf0] sm:$0xff] %v1726
          %1759 = vst [vmem:[#allocation7 + $0xf8] sm:$0xff] %v1727
        $region68: #{tpu_custom_call.1} parent=43 // pred_fallthru
          _
        // Predicated region
        $region69: #{tpu_custom_call.1} parent=43 // pred_check
          %p1760 = pneg %p186
        $region70: #{tpu_custom_call.1} parent=43 // pred_check_branch
          %1762 = sbr.rel (%p1760) target = $region72
        $region71: #{tpu_custom_call.1} parent=43 // pred_region
          %s1764 = ssub.s32 4096, 4096
          %1765 = vsyncadd [#allocation6], %s1764
          %s1766 = sshll.u32 [#allocation7], 4
          %s1767 = int_to_ptr.vmem [resolvable:$true] %s1766
          %1772 = dma.vmem_to_hbm [thread:$0]  %s1767, 4096, %s6, [#allocation6], 128, 128, 8
        $region72: #{tpu_custom_call.1} parent=43 // pred_fallthru
          _
        // Predicated region
        $region73: #{tpu_custom_call.1} parent=43 // pred_check
          %p1773 = pneg %p186
        $region74: #{tpu_custom_call.1} parent=43 // pred_check_branch
          %1775 = sbr.rel (%p1773) target = $region76
        $region75: #{tpu_custom_call.1} parent=43 // pred_region
          %1776 = dma.done [#allocation6], 4096
        $region76: #{tpu_custom_call.1} parent=43 // pred_fallthru
          _
      $region44: #{tpu_custom_call.1} parent=5 // pred_fallthru
        _
      %p1777 = scmp.le.s32.totalorder 2, %s16
      // Predicated region
      $region77: #{tpu_custom_call.1} parent=5 // pred_check
        %p1778 = pneg %p1777
      $region78: #{tpu_custom_call.1} parent=5 // pred_check_branch
        %1780 = sbr.rel (%p1778) target = $region80
      $region79: #{tpu_custom_call.1} parent=5 // pred_region
        %s1781 = ssub.s32 %s16, 2
      $region80: #{tpu_custom_call.1} parent=5 // pred_fallthru
        _
    $region6: #{tpu_custom_call.1} parent=1 // loop_footer
      %s20 = sadd.s32 1, %s16
    $region7: #{tpu_custom_call.1} parent=1 // loop_footer_branch
      %15 = sbr.rel target = $region3
    $region8: #{tpu_custom_call.1} parent=1 // loop_exit
      _
    %1782 = vsyncpa [#allocation5], 1
    %s1783 = scalar_lea.sflag [#allocation5], 1
    %1784 = vsyncpa %s1783, 1
    %1785 = vsyncpa [#allocation6], 1
    %s1786 = scalar_lea.sflag [#allocation6], 1
    %1787 = vsyncpa %s1786, 1

</llo_original>
